<compile_context>
chip_gen: v7x
topology: tpu7x:2x2x1
jax: 0.10.0
libtpu: 0.0.40
codegen_flags: <defaults>
</compile_context>

<pallas_src>
import jax
import jax.numpy as jnp
from jax.experimental import pallas as pl
from jax.experimental.pallas import tpu as pltpu


# -------------------- model configuration (small shapes) --------------------
T = 8            # sequence length
B = 8            # batch (multiple of 8 keeps sublane slices aligned)
OBS_SIZE = 19    # raw obs size
ACT_SIZE = 4
BELIEF = 32
HIDDEN = 32
MIN_STD = 1e-4
OBS_IN = OBS_SIZE - 3        # effective encoder input size (sphere_vel_in_obs)

# -------------------- padded / packed layout constants -----------------------
H = BELIEF                   # 32
GP = 128                     # per-gate lane group (padded from 32 -> 128)
G3 = 3 * GP                  # 384: padded width of fused r|z|n matrices
OBS_PAD = 32                 # obs padded to 32 cols; col 19 carries the 1.0 bias lane
OUT_PAD = 128                # lane-dense output (cols 0:4 mean, 4:8 std, rest junk)

# packed-parameter buffer row offsets (each block starts at a multiple of 8)
_R_W1 = 0        # rows  0:32  cols   0:32   encoder w1 (obs-drop + b1 folded in)
_R_W3 = 0        # rows  0:32  cols  32:64   decoder layer-1 weight
_R_W4 = 0        # rows  0:32  cols 128:256  decoder layer-2 weight (lane-padded)
_R_GW = 32       # rows 32:64  cols   0:384  fused input->gates weight (gate-padded)
_R_WH = 64       # rows 64:96  cols   0:384  hidden->gates weight (gate-padded)
_R_GB = 96       # row  96     cols   0:384  fused gate bias (bih + bhh_r/z folded)
_R_BV = 104      # row 104     cols 0:128 bhh_n | 128:160 b3 | 256:384 b4
_P_ROWS = 112


# ------------------------------ Pallas kernel --------------------------------
def _make_kernel(t_len, batch):
    A = ACT_SIZE

    def kernel(obs_ref,       # (T*B, OBS_PAD) padded obs, col 19 == 1.0
               p_ref,         # (112, 384) packed folded parameters
               out_ref,       # (T*B, OUT_PAD) lane-dense [mean | std | junk]
               gi_sc,         # VMEM (T*B, 384) scratch: fused input gates
               bel_sc):       # VMEM (T*B, H)   scratch: per-step beliefs
        # ---- unpack parameters from the single packed buffer ----
        w1p = p_ref[_R_W1:_R_W1 + OBS_PAD, 0:H]            # (32, 32)
        w3  = p_ref[_R_W3:_R_W3 + H, H:2 * H]               # (32, 32)
        w4p = p_ref[_R_W4:_R_W4 + HIDDEN, GP:2 * GP]        # (32, 128)
        gwp = p_ref[_R_GW:_R_GW + HIDDEN, :]                # (32, 384)
        whp = p_ref[_R_WH:_R_WH + H, :]                     # (32, 384)
        gbp = p_ref[_R_GB:_R_GB + 1, :]                     # (1, 384)
        bhn = p_ref[_R_BV:_R_BV + 1, 0:GP]                  # (1, 128) bhh_n (padded)
        b3  = p_ref[_R_BV:_R_BV + 1, GP:GP + H]             # (1, 32)
        b4p = p_ref[_R_BV:_R_BV + 1, 2 * GP:3 * GP]         # (1, 128)

        # ---- batched (time-independent) pre-pass over all T*B rows ----
        x = obs_ref[...]                                     # (T*B, 32)
        h1 = jnp.maximum(
            jnp.dot(x, w1p, preferred_element_type=jnp.float32), 0.0)
        gi_sc[...] = (jnp.dot(h1, gwp, preferred_element_type=jnp.float32)
                      + gbp)                                 # (T*B, 384)

        # ---- serial GRU recurrence (statically unrolled over T) ----
        bhn_b = jnp.broadcast_to(bhn, (batch, GP))           # hoisted broadcast
        h_pad = jnp.zeros((batch, GP), jnp.float32)          # lanes H:128 stay 0
        h = jnp.zeros((batch, H), jnp.float32)
        for t in range(t_len):
            gi = gi_sc[t * batch:(t + 1) * batch, :]         # (B, 384) from VMEM
            gh = jnp.dot(h, whp, preferred_element_type=jnp.float32)  # (B, 384)
            # single-EUP sigmoid:  sigmoid(x) = 0.5*(tanh(0.5*x)+1)
            r = 0.5 * (jnp.tanh(0.5 * (gi[:, 0:GP] + gh[:, 0:GP])) + 1.0)
            z = 0.5 * (jnp.tanh(0.5 * (gi[:, GP:2 * GP] + gh[:, GP:2 * GP])) + 1.0)
            n = jnp.tanh(gi[:, 2 * GP:3 * GP]
                         + r * (gh[:, 2 * GP:3 * GP] + bhn_b))
            h_pad = (1.0 - z) * n + z * h_pad
            h = h_pad[:, 0:H]                                # offset-0 lane slice
            bel_sc[t * batch:(t + 1) * batch, :] = h

        # ---- batched decoder over all T*B rows ----
        d1 = jnp.maximum(
            jnp.dot(bel_sc[...], w3, preferred_element_type=jnp.float32) + b3,
            0.0)
        out = (jnp.dot(d1, w4p, preferred_element_type=jnp.float32)
               + b4p)                                        # (T*B, 128)
        lane = jax.lax.broadcasted_iota(jnp.int32, out.shape, 1)
        out_ref[...] = jnp.where(lane < A, out, MIN_STD + jax.nn.softplus(out))

    return kernel


# ------------------- one-time parameter folding / packing --------------------
def pack_params(params):
    """Fold + gate/lane pad + pack all weights into one (112, 384) f32 buffer.

    Call ONCE whenever the weights change (not on every forward call).
    Note: the obs[..., 6:9] drop is folded as zero rows in w1, which is only
    equivalent to an explicit slice if those obs dims are always finite.
    """
    (w1, b1, w2, b2, wih, bih, whh, bhh, w3, b3, w4, b4) = params
    f32 = jnp.float32

    # encoder layer-1: obs-drop as zero rows, b1 folded via the constant-1 lane.
    w1p = jnp.zeros((OBS_PAD, HIDDEN), f32)
    w1p = w1p.at[0:6].set(w1[0:6]).at[9:OBS_SIZE].set(w1[6:])
    w1p = w1p.at[OBS_SIZE].set(b1[0])

    # fold encoder layer-2 into the GRU input projection; fold the r/z parts of
    # b_hh into the fused bias (the n part must stay inside r*(...)).
    gw = w2 @ wih                                   # (HIDDEN, 3H)
    gb = b2 @ wih + bih                             # (1, 3H)
    gb = gb.at[:, :2 * BELIEF].add(bhh[:, :2 * BELIEF])
    bhh_n = bhh[:, 2 * BELIEF:]                     # (1, H)

    def gate_pad(m):                                # (..., 3H) -> (..., 384)
        out = jnp.zeros(m.shape[:-1] + (G3,), f32)
        for g in range(3):
            out = out.at[..., g * GP:g * GP + BELIEF].set(
                m[..., g * BELIEF:(g + 1) * BELIEF])
        return out

    P = jnp.zeros((_P_ROWS, G3), f32)
    P = P.at[_R_W1:_R_W1 + OBS_PAD, 0:BELIEF].set(w1p)
    P = P.at[_R_W3:_R_W3 + BELIEF, BELIEF:2 * BELIEF].set(w3)
    P = P.at[_R_W4:_R_W4 + HIDDEN, GP:GP + 2 * ACT_SIZE].set(w4)
    P = P.at[_R_GW:_R_GW + HIDDEN, :].set(gate_pad(gw))
    P = P.at[_R_WH:_R_WH + BELIEF, :].set(gate_pad(whh))
    P = P.at[_R_GB, :].set(gate_pad(gb)[0])
    P = P.at[_R_BV, 0:BELIEF].set(bhh_n[0])
    P = P.at[_R_BV, GP:GP + HIDDEN].set(b3[0])
    P = P.at[_R_BV, 2 * GP:2 * GP + 2 * ACT_SIZE].set(b4[0])
    return P


# ------------------------------ host wrapper ---------------------------------
@jax.jit
def rnn_policy_forward(obs, packed_params):
    """obs: (T, B, OBS_SIZE) f32; packed_params from pack_params().
    Returns (action_means, action_stds), each (T, B, ACT_SIZE)."""
    t_len, batch = obs.shape[0], obs.shape[1]
    n = t_len * batch

    # pad obs to 32 lanes and set the constant-1.0 bias lane (col 19).
    obs_flat = obs.reshape(n, OBS_SIZE).astype(jnp.float32)
    obs_aug = jnp.zeros((n, OBS_PAD), jnp.float32)
    obs_aug = obs_aug.at[:, :OBS_SIZE].set(obs_flat).at[:, OBS_SIZE].set(1.0)

    out = pl.pallas_call(
        _make_kernel(t_len, batch),
        out_shape=jax.ShapeDtypeStruct((n, OUT_PAD), jnp.float32),
        grid=(1,),
        in_specs=[pl.BlockSpec((n, OBS_PAD), lambda i: (0, 0)),
                  pl.BlockSpec((_P_ROWS, G3), lambda i: (0, 0))],
        out_specs=pl.BlockSpec((n, OUT_PAD), lambda i: (0, 0)),
        scratch_shapes=[pltpu.VMEM((n, G3), jnp.float32),
                        pltpu.VMEM((n, BELIEF), jnp.float32)],
        compiler_params=pltpu.CompilerParams(
            dimension_semantics=("arbitrary",)),
    )(obs_aug, packed_params)

    out = out.reshape(t_len, batch, OUT_PAD)
    return out[..., :ACT_SIZE], out[..., ACT_SIZE:2 * ACT_SIZE]


# --------------------------- pure-JAX reference ------------------------------
def rnn_policy_reference(obs, params):
    obs = jnp.concatenate([obs[..., :6], obs[..., 9:]], axis=-1)
    (w1, b1, w2, b2, wih, bih, whh, bhh, w3, b3, w4, b4) = params
    embeds = jnp.maximum(obs @ w1 + b1, 0.0) @ w2 + b2           # (T, B, BELIEF)

    def gru_step(h, x):
        gi = x @ wih + bih
        gh = h @ whh + bhh
        Hs = BELIEF
        r = jax.nn.sigmoid(gi[:, :Hs] + gh[:, :Hs])
        z = jax.nn.sigmoid(gi[:, Hs:2 * Hs] + gh[:, Hs:2 * Hs])
        n = jnp.tanh(gi[:, 2 * Hs:] + r * gh[:, 2 * Hs:])
        h_new = (1.0 - z) * n + z * h
        return h_new, h_new

    h0 = jnp.zeros((obs.shape[1], BELIEF), jnp.float32)
    _, beliefs = jax.lax.scan(gru_step, h0, embeds)
    out = jnp.maximum(beliefs @ w3 + b3, 0.0) @ w4 + b4
    means = out[..., :ACT_SIZE]
    stds = MIN_STD + jax.nn.softplus(out[..., ACT_SIZE:])
    return means, stds


# ------------------------------- param init ----------------------------------
def init_params(key):
    ks = jax.random.split(key, 12)
    s = 0.1
    w1 = s * jax.random.normal(ks[0], (OBS_IN, HIDDEN), jnp.float32)
    b1 = s * jax.random.normal(ks[1], (1, HIDDEN), jnp.float32)
    w2 = s * jax.random.normal(ks[2], (HIDDEN, BELIEF), jnp.float32)
    b2 = s * jax.random.normal(ks[3], (1, BELIEF), jnp.float32)
    wih = s * jax.random.normal(ks[4], (BELIEF, 3 * BELIEF), jnp.float32)
    bih = s * jax.random.normal(ks[5], (1, 3 * BELIEF), jnp.float32)
    whh = s * jax.random.normal(ks[6], (BELIEF, 3 * BELIEF), jnp.float32)
    bhh = s * jax.random.normal(ks[7], (1, 3 * BELIEF), jnp.float32)
    w3 = s * jax.random.normal(ks[8], (BELIEF, HIDDEN), jnp.float32)
    b3 = s * jax.random.normal(ks[9], (1, HIDDEN), jnp.float32)
    w4 = s * jax.random.normal(ks[10], (HIDDEN, 2 * ACT_SIZE), jnp.float32)
    b4 = s * jax.random.normal(ks[11], (1, 2 * ACT_SIZE), jnp.float32)
    return (w1, b1, w2, b2, wih, bih, whh, bhh, w3, b3, w4, b4)


if __name__ == "__main__":
    key = jax.random.PRNGKey(0)
    k_obs, k_par = jax.random.split(key)
    obs = jax.random.normal(k_obs, (T, B, OBS_SIZE), jnp.float32)
    params = init_params(k_par)

    packed = pack_params(params)          # one-time fold/pack (hoisted out)
    packed = jax.block_until_ready(packed)

    means, stds = rnn_policy_forward(obs, packed)
    jax.block_until_ready((means, stds))

    ref_means, ref_stds = rnn_policy_reference(obs, params)
    assert means.shape == (T, B, ACT_SIZE) and stds.shape == (T, B, ACT_SIZE)
    assert jnp.allclose(means, ref_means, atol=1e-4, rtol=1e-4)
    assert jnp.allclose(stds, ref_stds, atol=1e-4, rtol=1e-4)

    print("KERNEL_OK")
</pallas_src>

<mosaic_0001>
module attributes {stable_mosaic.version = 11 : i64} {
  func.func @kernel(%arg0: i32, %arg1: memref<64x32xf32, #tpu.memory_space<vmem>>, %arg2: memref<112x384xf32, #tpu.memory_space<vmem>>, %arg3: memref<64x128xf32, #tpu.memory_space<vmem>>, %arg4: memref<64x384xf32, #tpu.memory_space<vmem>>, %arg5: memref<64x32xf32, #tpu.memory_space<vmem>>) attributes {dimension_semantics = [#tpu.dimension_semantics<arbitrary>], iteration_bounds = array<i64: 1>, scalar_prefetch = 0 : i64, scratch_operands = 2 : i64, tpu.core_type = #tpu.core_type<tc>, window_params = [{pipeline_mode = #tpu.pipeline_mode<synchronous>, transform_indices = @transform_0, window_bounds = array<i64: 64, 32>}, {pipeline_mode = #tpu.pipeline_mode<synchronous>, transform_indices = @transform_1, window_bounds = array<i64: 112, 384>}, {pipeline_mode = #tpu.pipeline_mode<synchronous>, transform_indices = @transform_2, window_bounds = array<i64: 64, 128>}]} {
    %c0 = arith.constant 0 : index
    %c0_0 = arith.constant 0 : index
    %0 = vector.load %arg2[%c0, %c0_0] : memref<112x384xf32, #tpu.memory_space<vmem>>, vector<32x32xf32>
    %c0_1 = arith.constant 0 : index
    %c32 = arith.constant 32 : index
    %1 = vector.load %arg2[%c0_1, %c32] : memref<112x384xf32, #tpu.memory_space<vmem>>, vector<32x32xf32>
    %c0_2 = arith.constant 0 : index
    %c128 = arith.constant 128 : index
    %2 = vector.load %arg2[%c0_2, %c128] : memref<112x384xf32, #tpu.memory_space<vmem>>, vector<32x128xf32>
    %c32_3 = arith.constant 32 : index
    %c0_4 = arith.constant 0 : index
    %3 = vector.load %arg2[%c32_3, %c0_4] : memref<112x384xf32, #tpu.memory_space<vmem>>, vector<32x384xf32>
    %c64 = arith.constant 64 : index
    %c0_5 = arith.constant 0 : index
    %4 = vector.load %arg2[%c64, %c0_5] : memref<112x384xf32, #tpu.memory_space<vmem>>, vector<32x384xf32>
    %c96 = arith.constant 96 : index
    %c0_6 = arith.constant 0 : index
    %5 = vector.load %arg2[%c96, %c0_6] : memref<112x384xf32, #tpu.memory_space<vmem>>, vector<1x384xf32>
    %c104 = arith.constant 104 : index
    %c0_7 = arith.constant 0 : index
    %6 = vector.load %arg2[%c104, %c0_7] : memref<112x384xf32, #tpu.memory_space<vmem>>, vector<1x128xf32>
    %c104_8 = arith.constant 104 : index
    %c128_9 = arith.constant 128 : index
    %7 = vector.load %arg2[%c104_8, %c128_9] : memref<112x384xf32, #tpu.memory_space<vmem>>, vector<1x32xf32>
    %c104_10 = arith.constant 104 : index
    %c256 = arith.constant 256 : index
    %8 = vector.load %arg2[%c104_10, %c256] : memref<112x384xf32, #tpu.memory_space<vmem>>, vector<1x128xf32>
    %c0_11 = arith.constant 0 : index
    %c0_12 = arith.constant 0 : index
    %9 = vector.load %arg1[%c0_11, %c0_12] : memref<64x32xf32, #tpu.memory_space<vmem>>, vector<64x32xf32>
    %cst = arith.constant dense<0.000000e+00> : vector<64x32xf32>
    %10 = tpu.matmul %9, %0, %cst {dimension_numbers = #tpu.dot_dimension_numbers<[1], [0], [0], [1], [0, 0, 1, 1], [], []>} : vector<64x32xf32>, vector<32x32xf32>, vector<64x32xf32> -> vector<64x32xf32>
    %cst_13 = arith.constant 0.000000e+00 : f32
    %11 = vector.broadcast %cst_13 : f32 to vector<64x32xf32>
    %12 = arith.maximumf %10, %11 : vector<64x32xf32>
    %cst_14 = arith.constant dense<0.000000e+00> : vector<64x384xf32>
    %13 = tpu.matmul %12, %3, %cst_14 {dimension_numbers = #tpu.dot_dimension_numbers<[1], [0], [0], [1], [0, 0, 1, 1], [], []>} : vector<64x32xf32>, vector<32x384xf32>, vector<64x384xf32> -> vector<64x384xf32>
    %14 = vector.broadcast %5 : vector<1x384xf32> to vector<64x384xf32>
    %15 = arith.addf %13, %14 : vector<64x384xf32>
    %c0_15 = arith.constant 0 : index
    %c0_16 = arith.constant 0 : index
    %16 = vector.load %arg4[%c0_15, %c0_16] : memref<64x384xf32, #tpu.memory_space<vmem>>, vector<64x384xf32>
    tpu.vector_store %arg4[%c0_15, %c0_16], %15 {strides = array<i32>} : memref<64x384xf32, #tpu.memory_space<vmem>>, vector<64x384xf32>,
    %17 = vector.shape_cast %6 : vector<1x128xf32> to vector<1x128xf32>
    %18 = vector.broadcast %17 : vector<1x128xf32> to vector<8x128xf32>
    %cst_17 = arith.constant 0.000000e+00 : f32
    %19 = vector.broadcast %cst_17 : f32 to vector<8x128xf32>
    %cst_18 = arith.constant 0.000000e+00 : f32
    %20 = vector.broadcast %cst_18 : f32 to vector<8x32xf32>
    %c0_19 = arith.constant 0 : index
    %c0_20 = arith.constant 0 : index
    %21 = vector.load %arg4[%c0_19, %c0_20] : memref<64x384xf32, #tpu.memory_space<vmem>>, vector<8x384xf32>
    %cst_21 = arith.constant dense<0.000000e+00> : vector<8x384xf32>
    %22 = tpu.matmul %20, %4, %cst_21 {dimension_numbers = #tpu.dot_dimension_numbers<[1], [0], [0], [1], [0, 0, 1, 1], [], []>} : vector<8x32xf32>, vector<32x384xf32>, vector<8x384xf32> -> vector<8x384xf32>
    %23 = vector.extract_strided_slice %21 {offsets = [0, 0], sizes = [8, 128], strides = [1, 1]} : vector<8x384xf32> to vector<8x128xf32>
    %24 = vector.extract_strided_slice %22 {offsets = [0, 0], sizes = [8, 128], strides = [1, 1]} : vector<8x384xf32> to vector<8x128xf32>
    %25 = arith.addf %23, %24 : vector<8x128xf32>
    %cst_22 = arith.constant 5.000000e-01 : f32
    %26 = vector.broadcast %cst_22 : f32 to vector<8x128xf32>
    %27 = arith.mulf %26, %25 : vector<8x128xf32>
    %28 = math.tanh %27 : vector<8x128xf32>
    %cst_23 = arith.constant 1.000000e+00 : f32
    %29 = vector.broadcast %cst_23 : f32 to vector<8x128xf32>
    %30 = arith.addf %28, %29 : vector<8x128xf32>
    %cst_24 = arith.constant 5.000000e-01 : f32
    %31 = vector.broadcast %cst_24 : f32 to vector<8x128xf32>
    %32 = arith.mulf %31, %30 : vector<8x128xf32>
    %33 = vector.extract_strided_slice %21 {offsets = [0, 128], sizes = [8, 128], strides = [1, 1]} : vector<8x384xf32> to vector<8x128xf32>
    %34 = vector.extract_strided_slice %22 {offsets = [0, 128], sizes = [8, 128], strides = [1, 1]} : vector<8x384xf32> to vector<8x128xf32>
    %35 = arith.addf %33, %34 : vector<8x128xf32>
    %cst_25 = arith.constant 5.000000e-01 : f32
    %36 = vector.broadcast %cst_25 : f32 to vector<8x128xf32>
    %37 = arith.mulf %36, %35 : vector<8x128xf32>
    %38 = math.tanh %37 : vector<8x128xf32>
    %cst_26 = arith.constant 1.000000e+00 : f32
    %39 = vector.broadcast %cst_26 : f32 to vector<8x128xf32>
    %40 = arith.addf %38, %39 : vector<8x128xf32>
    %cst_27 = arith.constant 5.000000e-01 : f32
    %41 = vector.broadcast %cst_27 : f32 to vector<8x128xf32>
    %42 = arith.mulf %41, %40 : vector<8x128xf32>
    %43 = vector.extract_strided_slice %21 {offsets = [0, 256], sizes = [8, 128], strides = [1, 1]} : vector<8x384xf32> to vector<8x128xf32>
    %44 = vector.extract_strided_slice %22 {offsets = [0, 256], sizes = [8, 128], strides = [1, 1]} : vector<8x384xf32> to vector<8x128xf32>
    %45 = arith.addf %44, %18 : vector<8x128xf32>
    %46 = arith.mulf %32, %45 : vector<8x128xf32>
    %47 = arith.addf %43, %46 : vector<8x128xf32>
    %48 = math.tanh %47 : vector<8x128xf32>
    %cst_28 = arith.constant 1.000000e+00 : f32
    %49 = vector.broadcast %cst_28 : f32 to vector<8x128xf32>
    %50 = arith.subf %49, %42 : vector<8x128xf32>
    %51 = arith.mulf %50, %48 : vector<8x128xf32>
    %52 = arith.mulf %42, %19 : vector<8x128xf32>
    %53 = arith.addf %51, %52 : vector<8x128xf32>
    %54 = vector.extract_strided_slice %53 {offsets = [0, 0], sizes = [8, 32], strides = [1, 1]} : vector<8x128xf32> to vector<8x32xf32>
    %c0_29 = arith.constant 0 : index
    %c0_30 = arith.constant 0 : index
    %55 = vector.load %arg5[%c0_29, %c0_30] : memref<64x32xf32, #tpu.memory_space<vmem>>, vector<8x32xf32>
    tpu.vector_store %arg5[%c0_29, %c0_30], %54 {strides = array<i32>} : memref<64x32xf32, #tpu.memory_space<vmem>>, vector<8x32xf32>,
    %c8 = arith.constant 8 : index
    %c0_31 = arith.constant 0 : index
    %56 = vector.load %arg4[%c8, %c0_31] : memref<64x384xf32, #tpu.memory_space<vmem>>, vector<8x384xf32>
    %cst_32 = arith.constant dense<0.000000e+00> : vector<8x384xf32>
    %57 = tpu.matmul %54, %4, %cst_32 {dimension_numbers = #tpu.dot_dimension_numbers<[1], [0], [0], [1], [0, 0, 1, 1], [], []>} : vector<8x32xf32>, vector<32x384xf32>, vector<8x384xf32> -> vector<8x384xf32>
    %58 = vector.extract_strided_slice %56 {offsets = [0, 0], sizes = [8, 128], strides = [1, 1]} : vector<8x384xf32> to vector<8x128xf32>
    %59 = vector.extract_strided_slice %57 {offsets = [0, 0], sizes = [8, 128], strides = [1, 1]} : vector<8x384xf32> to vector<8x128xf32>
    %60 = arith.addf %58, %59 : vector<8x128xf32>
    %cst_33 = arith.constant 5.000000e-01 : f32
    %61 = vector.broadcast %cst_33 : f32 to vector<8x128xf32>
    %62 = arith.mulf %61, %60 : vector<8x128xf32>
    %63 = math.tanh %62 : vector<8x128xf32>
    %cst_34 = arith.constant 1.000000e+00 : f32
    %64 = vector.broadcast %cst_34 : f32 to vector<8x128xf32>
    %65 = arith.addf %63, %64 : vector<8x128xf32>
    %cst_35 = arith.constant 5.000000e-01 : f32
    %66 = vector.broadcast %cst_35 : f32 to vector<8x128xf32>
    %67 = arith.mulf %66, %65 : vector<8x128xf32>
    %68 = vector.extract_strided_slice %56 {offsets = [0, 128], sizes = [8, 128], strides = [1, 1]} : vector<8x384xf32> to vector<8x128xf32>
    %69 = vector.extract_strided_slice %57 {offsets = [0, 128], sizes = [8, 128], strides = [1, 1]} : vector<8x384xf32> to vector<8x128xf32>
    %70 = arith.addf %68, %69 : vector<8x128xf32>
    %cst_36 = arith.constant 5.000000e-01 : f32
    %71 = vector.broadcast %cst_36 : f32 to vector<8x128xf32>
    %72 = arith.mulf %71, %70 : vector<8x128xf32>
    %73 = math.tanh %72 : vector<8x128xf32>
    %cst_37 = arith.constant 1.000000e+00 : f32
    %74 = vector.broadcast %cst_37 : f32 to vector<8x128xf32>
    %75 = arith.addf %73, %74 : vector<8x128xf32>
    %cst_38 = arith.constant 5.000000e-01 : f32
    %76 = vector.broadcast %cst_38 : f32 to vector<8x128xf32>
    %77 = arith.mulf %76, %75 : vector<8x128xf32>
    %78 = vector.extract_strided_slice %56 {offsets = [0, 256], sizes = [8, 128], strides = [1, 1]} : vector<8x384xf32> to vector<8x128xf32>
    %79 = vector.extract_strided_slice %57 {offsets = [0, 256], sizes = [8, 128], strides = [1, 1]} : vector<8x384xf32> to vector<8x128xf32>
    %80 = arith.addf %79, %18 : vector<8x128xf32>
    %81 = arith.mulf %67, %80 : vector<8x128xf32>
    %82 = arith.addf %78, %81 : vector<8x128xf32>
    %83 = math.tanh %82 : vector<8x128xf32>
    %cst_39 = arith.constant 1.000000e+00 : f32
    %84 = vector.broadcast %cst_39 : f32 to vector<8x128xf32>
    %85 = arith.subf %84, %77 : vector<8x128xf32>
    %86 = arith.mulf %85, %83 : vector<8x128xf32>
    %87 = arith.mulf %77, %53 : vector<8x128xf32>
    %88 = arith.addf %86, %87 : vector<8x128xf32>
    %89 = vector.extract_strided_slice %88 {offsets = [0, 0], sizes = [8, 32], strides = [1, 1]} : vector<8x128xf32> to vector<8x32xf32>
    %c8_40 = arith.constant 8 : index
    %c0_41 = arith.constant 0 : index
    %90 = vector.load %arg5[%c8_40, %c0_41] : memref<64x32xf32, #tpu.memory_space<vmem>>, vector<8x32xf32>
    tpu.vector_store %arg5[%c8_40, %c0_41], %89 {strides = array<i32>} : memref<64x32xf32, #tpu.memory_space<vmem>>, vector<8x32xf32>,
    %c16 = arith.constant 16 : index
    %c0_42 = arith.constant 0 : index
    %91 = vector.load %arg4[%c16, %c0_42] : memref<64x384xf32, #tpu.memory_space<vmem>>, vector<8x384xf32>
    %cst_43 = arith.constant dense<0.000000e+00> : vector<8x384xf32>
    %92 = tpu.matmul %89, %4, %cst_43 {dimension_numbers = #tpu.dot_dimension_numbers<[1], [0], [0], [1], [0, 0, 1, 1], [], []>} : vector<8x32xf32>, vector<32x384xf32>, vector<8x384xf32> -> vector<8x384xf32>
    %93 = vector.extract_strided_slice %91 {offsets = [0, 0], sizes = [8, 128], strides = [1, 1]} : vector<8x384xf32> to vector<8x128xf32>
    %94 = vector.extract_strided_slice %92 {offsets = [0, 0], sizes = [8, 128], strides = [1, 1]} : vector<8x384xf32> to vector<8x128xf32>
    %95 = arith.addf %93, %94 : vector<8x128xf32>
    %cst_44 = arith.constant 5.000000e-01 : f32
    %96 = vector.broadcast %cst_44 : f32 to vector<8x128xf32>
    %97 = arith.mulf %96, %95 : vector<8x128xf32>
    %98 = math.tanh %97 : vector<8x128xf32>
    %cst_45 = arith.constant 1.000000e+00 : f32
    %99 = vector.broadcast %cst_45 : f32 to vector<8x128xf32>
    %100 = arith.addf %98, %99 : vector<8x128xf32>
    %cst_46 = arith.constant 5.000000e-01 : f32
    %101 = vector.broadcast %cst_46 : f32 to vector<8x128xf32>
    %102 = arith.mulf %101, %100 : vector<8x128xf32>
    %103 = vector.extract_strided_slice %91 {offsets = [0, 128], sizes = [8, 128], strides = [1, 1]} : vector<8x384xf32> to vector<8x128xf32>
    %104 = vector.extract_strided_slice %92 {offsets = [0, 128], sizes = [8, 128], strides = [1, 1]} : vector<8x384xf32> to vector<8x128xf32>
    %105 = arith.addf %103, %104 : vector<8x128xf32>
    %cst_47 = arith.constant 5.000000e-01 : f32
    %106 = vector.broadcast %cst_47 : f32 to vector<8x128xf32>
    %107 = arith.mulf %106, %105 : vector<8x128xf32>
    %108 = math.tanh %107 : vector<8x128xf32>
    %cst_48 = arith.constant 1.000000e+00 : f32
    %109 = vector.broadcast %cst_48 : f32 to vector<8x128xf32>
    %110 = arith.addf %108, %109 : vector<8x128xf32>
    %cst_49 = arith.constant 5.000000e-01 : f32
    %111 = vector.broadcast %cst_49 : f32 to vector<8x128xf32>
    %112 = arith.mulf %111, %110 : vector<8x128xf32>
    %113 = vector.extract_strided_slice %91 {offsets = [0, 256], sizes = [8, 128], strides = [1, 1]} : vector<8x384xf32> to vector<8x128xf32>
    %114 = vector.extract_strided_slice %92 {offsets = [0, 256], sizes = [8, 128], strides = [1, 1]} : vector<8x384xf32> to vector<8x128xf32>
    %115 = arith.addf %114, %18 : vector<8x128xf32>
    %116 = arith.mulf %102, %115 : vector<8x128xf32>
    %117 = arith.addf %113, %116 : vector<8x128xf32>
    %118 = math.tanh %117 : vector<8x128xf32>
    %cst_50 = arith.constant 1.000000e+00 : f32
    %119 = vector.broadcast %cst_50 : f32 to vector<8x128xf32>
    %120 = arith.subf %119, %112 : vector<8x128xf32>
    %121 = arith.mulf %120, %118 : vector<8x128xf32>
    %122 = arith.mulf %112, %88 : vector<8x128xf32>
    %123 = arith.addf %121, %122 : vector<8x128xf32>
    %124 = vector.extract_strided_slice %123 {offsets = [0, 0], sizes = [8, 32], strides = [1, 1]} : vector<8x128xf32> to vector<8x32xf32>
    %c16_51 = arith.constant 16 : index
    %c0_52 = arith.constant 0 : index
    %125 = vector.load %arg5[%c16_51, %c0_52] : memref<64x32xf32, #tpu.memory_space<vmem>>, vector<8x32xf32>
    tpu.vector_store %arg5[%c16_51, %c0_52], %124 {strides = array<i32>} : memref<64x32xf32, #tpu.memory_space<vmem>>, vector<8x32xf32>,
    %c24 = arith.constant 24 : index
    %c0_53 = arith.constant 0 : index
    %126 = vector.load %arg4[%c24, %c0_53] : memref<64x384xf32, #tpu.memory_space<vmem>>, vector<8x384xf32>
    %cst_54 = arith.constant dense<0.000000e+00> : vector<8x384xf32>
    %127 = tpu.matmul %124, %4, %cst_54 {dimension_numbers = #tpu.dot_dimension_numbers<[1], [0], [0], [1], [0, 0, 1, 1], [], []>} : vector<8x32xf32>, vector<32x384xf32>, vector<8x384xf32> -> vector<8x384xf32>
    %128 = vector.extract_strided_slice %126 {offsets = [0, 0], sizes = [8, 128], strides = [1, 1]} : vector<8x384xf32> to vector<8x128xf32>
    %129 = vector.extract_strided_slice %127 {offsets = [0, 0], sizes = [8, 128], strides = [1, 1]} : vector<8x384xf32> to vector<8x128xf32>
    %130 = arith.addf %128, %129 : vector<8x128xf32>
    %cst_55 = arith.constant 5.000000e-01 : f32
    %131 = vector.broadcast %cst_55 : f32 to vector<8x128xf32>
    %132 = arith.mulf %131, %130 : vector<8x128xf32>
    %133 = math.tanh %132 : vector<8x128xf32>
    %cst_56 = arith.constant 1.000000e+00 : f32
    %134 = vector.broadcast %cst_56 : f32 to vector<8x128xf32>
    %135 = arith.addf %133, %134 : vector<8x128xf32>
    %cst_57 = arith.constant 5.000000e-01 : f32
    %136 = vector.broadcast %cst_57 : f32 to vector<8x128xf32>
    %137 = arith.mulf %136, %135 : vector<8x128xf32>
    %138 = vector.extract_strided_slice %126 {offsets = [0, 128], sizes = [8, 128], strides = [1, 1]} : vector<8x384xf32> to vector<8x128xf32>
    %139 = vector.extract_strided_slice %127 {offsets = [0, 128], sizes = [8, 128], strides = [1, 1]} : vector<8x384xf32> to vector<8x128xf32>
    %140 = arith.addf %138, %139 : vector<8x128xf32>
    %cst_58 = arith.constant 5.000000e-01 : f32
    %141 = vector.broadcast %cst_58 : f32 to vector<8x128xf32>
    %142 = arith.mulf %141, %140 : vector<8x128xf32>
    %143 = math.tanh %142 : vector<8x128xf32>
    %cst_59 = arith.constant 1.000000e+00 : f32
    %144 = vector.broadcast %cst_59 : f32 to vector<8x128xf32>
    %145 = arith.addf %143, %144 : vector<8x128xf32>
    %cst_60 = arith.constant 5.000000e-01 : f32
    %146 = vector.broadcast %cst_60 : f32 to vector<8x128xf32>
    %147 = arith.mulf %146, %145 : vector<8x128xf32>
    %148 = vector.extract_strided_slice %126 {offsets = [0, 256], sizes = [8, 128], strides = [1, 1]} : vector<8x384xf32> to vector<8x128xf32>
    %149 = vector.extract_strided_slice %127 {offsets = [0, 256], sizes = [8, 128], strides = [1, 1]} : vector<8x384xf32> to vector<8x128xf32>
    %150 = arith.addf %149, %18 : vector<8x128xf32>
    %151 = arith.mulf %137, %150 : vector<8x128xf32>
    %152 = arith.addf %148, %151 : vector<8x128xf32>
    %153 = math.tanh %152 : vector<8x128xf32>
    %cst_61 = arith.constant 1.000000e+00 : f32
    %154 = vector.broadcast %cst_61 : f32 to vector<8x128xf32>
    %155 = arith.subf %154, %147 : vector<8x128xf32>
    %156 = arith.mulf %155, %153 : vector<8x128xf32>
    %157 = arith.mulf %147, %123 : vector<8x128xf32>
    %158 = arith.addf %156, %157 : vector<8x128xf32>
    %159 = vector.extract_strided_slice %158 {offsets = [0, 0], sizes = [8, 32], strides = [1, 1]} : vector<8x128xf32> to vector<8x32xf32>
    %c24_62 = arith.constant 24 : index
    %c0_63 = arith.constant 0 : index
    %160 = vector.load %arg5[%c24_62, %c0_63] : memref<64x32xf32, #tpu.memory_space<vmem>>, vector<8x32xf32>
    tpu.vector_store %arg5[%c24_62, %c0_63], %159 {strides = array<i32>} : memref<64x32xf32, #tpu.memory_space<vmem>>, vector<8x32xf32>,
    %c32_64 = arith.constant 32 : index
    %c0_65 = arith.constant 0 : index
    %161 = vector.load %arg4[%c32_64, %c0_65] : memref<64x384xf32, #tpu.memory_space<vmem>>, vector<8x384xf32>
    %cst_66 = arith.constant dense<0.000000e+00> : vector<8x384xf32>
    %162 = tpu.matmul %159, %4, %cst_66 {dimension_numbers = #tpu.dot_dimension_numbers<[1], [0], [0], [1], [0, 0, 1, 1], [], []>} : vector<8x32xf32>, vector<32x384xf32>, vector<8x384xf32> -> vector<8x384xf32>
    %163 = vector.extract_strided_slice %161 {offsets = [0, 0], sizes = [8, 128], strides = [1, 1]} : vector<8x384xf32> to vector<8x128xf32>
    %164 = vector.extract_strided_slice %162 {offsets = [0, 0], sizes = [8, 128], strides = [1, 1]} : vector<8x384xf32> to vector<8x128xf32>
    %165 = arith.addf %163, %164 : vector<8x128xf32>
    %cst_67 = arith.constant 5.000000e-01 : f32
    %166 = vector.broadcast %cst_67 : f32 to vector<8x128xf32>
    %167 = arith.mulf %166, %165 : vector<8x128xf32>
    %168 = math.tanh %167 : vector<8x128xf32>
    %cst_68 = arith.constant 1.000000e+00 : f32
    %169 = vector.broadcast %cst_68 : f32 to vector<8x128xf32>
    %170 = arith.addf %168, %169 : vector<8x128xf32>
    %cst_69 = arith.constant 5.000000e-01 : f32
    %171 = vector.broadcast %cst_69 : f32 to vector<8x128xf32>
    %172 = arith.mulf %171, %170 : vector<8x128xf32>
    %173 = vector.extract_strided_slice %161 {offsets = [0, 128], sizes = [8, 128], strides = [1, 1]} : vector<8x384xf32> to vector<8x128xf32>
    %174 = vector.extract_strided_slice %162 {offsets = [0, 128], sizes = [8, 128], strides = [1, 1]} : vector<8x384xf32> to vector<8x128xf32>
    %175 = arith.addf %173, %174 : vector<8x128xf32>
    %cst_70 = arith.constant 5.000000e-01 : f32
    %176 = vector.broadcast %cst_70 : f32 to vector<8x128xf32>
    %177 = arith.mulf %176, %175 : vector<8x128xf32>
    %178 = math.tanh %177 : vector<8x128xf32>
    %cst_71 = arith.constant 1.000000e+00 : f32
    %179 = vector.broadcast %cst_71 : f32 to vector<8x128xf32>
    %180 = arith.addf %178, %179 : vector<8x128xf32>
    %cst_72 = arith.constant 5.000000e-01 : f32
    %181 = vector.broadcast %cst_72 : f32 to vector<8x128xf32>
    %182 = arith.mulf %181, %180 : vector<8x128xf32>
    %183 = vector.extract_strided_slice %161 {offsets = [0, 256], sizes = [8, 128], strides = [1, 1]} : vector<8x384xf32> to vector<8x128xf32>
    %184 = vector.extract_strided_slice %162 {offsets = [0, 256], sizes = [8, 128], strides = [1, 1]} : vector<8x384xf32> to vector<8x128xf32>
    %185 = arith.addf %184, %18 : vector<8x128xf32>
    %186 = arith.mulf %172, %185 : vector<8x128xf32>
    %187 = arith.addf %183, %186 : vector<8x128xf32>
    %188 = math.tanh %187 : vector<8x128xf32>
    %cst_73 = arith.constant 1.000000e+00 : f32
    %189 = vector.broadcast %cst_73 : f32 to vector<8x128xf32>
    %190 = arith.subf %189, %182 : vector<8x128xf32>
    %191 = arith.mulf %190, %188 : vector<8x128xf32>
    %192 = arith.mulf %182, %158 : vector<8x128xf32>
    %193 = arith.addf %191, %192 : vector<8x128xf32>
    %194 = vector.extract_strided_slice %193 {offsets = [0, 0], sizes = [8, 32], strides = [1, 1]} : vector<8x128xf32> to vector<8x32xf32>
    %c32_74 = arith.constant 32 : index
    %c0_75 = arith.constant 0 : index
    %195 = vector.load %arg5[%c32_74, %c0_75] : memref<64x32xf32, #tpu.memory_space<vmem>>, vector<8x32xf32>
    tpu.vector_store %arg5[%c32_74, %c0_75], %194 {strides = array<i32>} : memref<64x32xf32, #tpu.memory_space<vmem>>, vector<8x32xf32>,
    %c40 = arith.constant 40 : index
    %c0_76 = arith.constant 0 : index
    %196 = vector.load %arg4[%c40, %c0_76] : memref<64x384xf32, #tpu.memory_space<vmem>>, vector<8x384xf32>
    %cst_77 = arith.constant dense<0.000000e+00> : vector<8x384xf32>
    %197 = tpu.matmul %194, %4, %cst_77 {dimension_numbers = #tpu.dot_dimension_numbers<[1], [0], [0], [1], [0, 0, 1, 1], [], []>} : vector<8x32xf32>, vector<32x384xf32>, vector<8x384xf32> -> vector<8x384xf32>
    %198 = vector.extract_strided_slice %196 {offsets = [0, 0], sizes = [8, 128], strides = [1, 1]} : vector<8x384xf32> to vector<8x128xf32>
    %199 = vector.extract_strided_slice %197 {offsets = [0, 0], sizes = [8, 128], strides = [1, 1]} : vector<8x384xf32> to vector<8x128xf32>
    %200 = arith.addf %198, %199 : vector<8x128xf32>
    %cst_78 = arith.constant 5.000000e-01 : f32
    %201 = vector.broadcast %cst_78 : f32 to vector<8x128xf32>
    %202 = arith.mulf %201, %200 : vector<8x128xf32>
    %203 = math.tanh %202 : vector<8x128xf32>
    %cst_79 = arith.constant 1.000000e+00 : f32
    %204 = vector.broadcast %cst_79 : f32 to vector<8x128xf32>
    %205 = arith.addf %203, %204 : vector<8x128xf32>
    %cst_80 = arith.constant 5.000000e-01 : f32
    %206 = vector.broadcast %cst_80 : f32 to vector<8x128xf32>
    %207 = arith.mulf %206, %205 : vector<8x128xf32>
    %208 = vector.extract_strided_slice %196 {offsets = [0, 128], sizes = [8, 128], strides = [1, 1]} : vector<8x384xf32> to vector<8x128xf32>
    %209 = vector.extract_strided_slice %197 {offsets = [0, 128], sizes = [8, 128], strides = [1, 1]} : vector<8x384xf32> to vector<8x128xf32>
    %210 = arith.addf %208, %209 : vector<8x128xf32>
    %cst_81 = arith.constant 5.000000e-01 : f32
    %211 = vector.broadcast %cst_81 : f32 to vector<8x128xf32>
    %212 = arith.mulf %211, %210 : vector<8x128xf32>
    %213 = math.tanh %212 : vector<8x128xf32>
    %cst_82 = arith.constant 1.000000e+00 : f32
    %214 = vector.broadcast %cst_82 : f32 to vector<8x128xf32>
    %215 = arith.addf %213, %214 : vector<8x128xf32>
    %cst_83 = arith.constant 5.000000e-01 : f32
    %216 = vector.broadcast %cst_83 : f32 to vector<8x128xf32>
    %217 = arith.mulf %216, %215 : vector<8x128xf32>
    %218 = vector.extract_strided_slice %196 {offsets = [0, 256], sizes = [8, 128], strides = [1, 1]} : vector<8x384xf32> to vector<8x128xf32>
    %219 = vector.extract_strided_slice %197 {offsets = [0, 256], sizes = [8, 128], strides = [1, 1]} : vector<8x384xf32> to vector<8x128xf32>
    %220 = arith.addf %219, %18 : vector<8x128xf32>
    %221 = arith.mulf %207, %220 : vector<8x128xf32>
    %222 = arith.addf %218, %221 : vector<8x128xf32>
    %223 = math.tanh %222 : vector<8x128xf32>
    %cst_84 = arith.constant 1.000000e+00 : f32
    %224 = vector.broadcast %cst_84 : f32 to vector<8x128xf32>
    %225 = arith.subf %224, %217 : vector<8x128xf32>
    %226 = arith.mulf %225, %223 : vector<8x128xf32>
    %227 = arith.mulf %217, %193 : vector<8x128xf32>
    %228 = arith.addf %226, %227 : vector<8x128xf32>
    %229 = vector.extract_strided_slice %228 {offsets = [0, 0], sizes = [8, 32], strides = [1, 1]} : vector<8x128xf32> to vector<8x32xf32>
    %c40_85 = arith.constant 40 : index
    %c0_86 = arith.constant 0 : index
    %230 = vector.load %arg5[%c40_85, %c0_86] : memref<64x32xf32, #tpu.memory_space<vmem>>, vector<8x32xf32>
    tpu.vector_store %arg5[%c40_85, %c0_86], %229 {strides = array<i32>} : memref<64x32xf32, #tpu.memory_space<vmem>>, vector<8x32xf32>,
    %c48 = arith.constant 48 : index
    %c0_87 = arith.constant 0 : index
    %231 = vector.load %arg4[%c48, %c0_87] : memref<64x384xf32, #tpu.memory_space<vmem>>, vector<8x384xf32>
    %cst_88 = arith.constant dense<0.000000e+00> : vector<8x384xf32>
    %232 = tpu.matmul %229, %4, %cst_88 {dimension_numbers = #tpu.dot_dimension_numbers<[1], [0], [0], [1], [0, 0, 1, 1], [], []>} : vector<8x32xf32>, vector<32x384xf32>, vector<8x384xf32> -> vector<8x384xf32>
    %233 = vector.extract_strided_slice %231 {offsets = [0, 0], sizes = [8, 128], strides = [1, 1]} : vector<8x384xf32> to vector<8x128xf32>
    %234 = vector.extract_strided_slice %232 {offsets = [0, 0], sizes = [8, 128], strides = [1, 1]} : vector<8x384xf32> to vector<8x128xf32>
    %235 = arith.addf %233, %234 : vector<8x128xf32>
    %cst_89 = arith.constant 5.000000e-01 : f32
    %236 = vector.broadcast %cst_89 : f32 to vector<8x128xf32>
    %237 = arith.mulf %236, %235 : vector<8x128xf32>
    %238 = math.tanh %237 : vector<8x128xf32>
    %cst_90 = arith.constant 1.000000e+00 : f32
    %239 = vector.broadcast %cst_90 : f32 to vector<8x128xf32>
    %240 = arith.addf %238, %239 : vector<8x128xf32>
    %cst_91 = arith.constant 5.000000e-01 : f32
    %241 = vector.broadcast %cst_91 : f32 to vector<8x128xf32>
    %242 = arith.mulf %241, %240 : vector<8x128xf32>
    %243 = vector.extract_strided_slice %231 {offsets = [0, 128], sizes = [8, 128], strides = [1, 1]} : vector<8x384xf32> to vector<8x128xf32>
    %244 = vector.extract_strided_slice %232 {offsets = [0, 128], sizes = [8, 128], strides = [1, 1]} : vector<8x384xf32> to vector<8x128xf32>
    %245 = arith.addf %243, %244 : vector<8x128xf32>
    %cst_92 = arith.constant 5.000000e-01 : f32
    %246 = vector.broadcast %cst_92 : f32 to vector<8x128xf32>
    %247 = arith.mulf %246, %245 : vector<8x128xf32>
    %248 = math.tanh %247 : vector<8x128xf32>
    %cst_93 = arith.constant 1.000000e+00 : f32
    %249 = vector.broadcast %cst_93 : f32 to vector<8x128xf32>
    %250 = arith.addf %248, %249 : vector<8x128xf32>
    %cst_94 = arith.constant 5.000000e-01 : f32
    %251 = vector.broadcast %cst_94 : f32 to vector<8x128xf32>
    %252 = arith.mulf %251, %250 : vector<8x128xf32>
    %253 = vector.extract_strided_slice %231 {offsets = [0, 256], sizes = [8, 128], strides = [1, 1]} : vector<8x384xf32> to vector<8x128xf32>
    %254 = vector.extract_strided_slice %232 {offsets = [0, 256], sizes = [8, 128], strides = [1, 1]} : vector<8x384xf32> to vector<8x128xf32>
    %255 = arith.addf %254, %18 : vector<8x128xf32>
    %256 = arith.mulf %242, %255 : vector<8x128xf32>
    %257 = arith.addf %253, %256 : vector<8x128xf32>
    %258 = math.tanh %257 : vector<8x128xf32>
    %cst_95 = arith.constant 1.000000e+00 : f32
    %259 = vector.broadcast %cst_95 : f32 to vector<8x128xf32>
    %260 = arith.subf %259, %252 : vector<8x128xf32>
    %261 = arith.mulf %260, %258 : vector<8x128xf32>
    %262 = arith.mulf %252, %228 : vector<8x128xf32>
    %263 = arith.addf %261, %262 : vector<8x128xf32>
    %264 = vector.extract_strided_slice %263 {offsets = [0, 0], sizes = [8, 32], strides = [1, 1]} : vector<8x128xf32> to vector<8x32xf32>
    %c48_96 = arith.constant 48 : index
    %c0_97 = arith.constant 0 : index
    %265 = vector.load %arg5[%c48_96, %c0_97] : memref<64x32xf32, #tpu.memory_space<vmem>>, vector<8x32xf32>
    tpu.vector_store %arg5[%c48_96, %c0_97], %264 {strides = array<i32>} : memref<64x32xf32, #tpu.memory_space<vmem>>, vector<8x32xf32>,
    %c56 = arith.constant 56 : index
    %c0_98 = arith.constant 0 : index
    %266 = vector.load %arg4[%c56, %c0_98] : memref<64x384xf32, #tpu.memory_space<vmem>>, vector<8x384xf32>
    %cst_99 = arith.constant dense<0.000000e+00> : vector<8x384xf32>
    %267 = tpu.matmul %264, %4, %cst_99 {dimension_numbers = #tpu.dot_dimension_numbers<[1], [0], [0], [1], [0, 0, 1, 1], [], []>} : vector<8x32xf32>, vector<32x384xf32>, vector<8x384xf32> -> vector<8x384xf32>
    %268 = vector.extract_strided_slice %266 {offsets = [0, 0], sizes = [8, 128], strides = [1, 1]} : vector<8x384xf32> to vector<8x128xf32>
    %269 = vector.extract_strided_slice %267 {offsets = [0, 0], sizes = [8, 128], strides = [1, 1]} : vector<8x384xf32> to vector<8x128xf32>
    %270 = arith.addf %268, %269 : vector<8x128xf32>
    %cst_100 = arith.constant 5.000000e-01 : f32
    %271 = vector.broadcast %cst_100 : f32 to vector<8x128xf32>
    %272 = arith.mulf %271, %270 : vector<8x128xf32>
    %273 = math.tanh %272 : vector<8x128xf32>
    %cst_101 = arith.constant 1.000000e+00 : f32
    %274 = vector.broadcast %cst_101 : f32 to vector<8x128xf32>
    %275 = arith.addf %273, %274 : vector<8x128xf32>
    %cst_102 = arith.constant 5.000000e-01 : f32
    %276 = vector.broadcast %cst_102 : f32 to vector<8x128xf32>
    %277 = arith.mulf %276, %275 : vector<8x128xf32>
    %278 = vector.extract_strided_slice %266 {offsets = [0, 128], sizes = [8, 128], strides = [1, 1]} : vector<8x384xf32> to vector<8x128xf32>
    %279 = vector.extract_strided_slice %267 {offsets = [0, 128], sizes = [8, 128], strides = [1, 1]} : vector<8x384xf32> to vector<8x128xf32>
    %280 = arith.addf %278, %279 : vector<8x128xf32>
    %cst_103 = arith.constant 5.000000e-01 : f32
    %281 = vector.broadcast %cst_103 : f32 to vector<8x128xf32>
    %282 = arith.mulf %281, %280 : vector<8x128xf32>
    %283 = math.tanh %282 : vector<8x128xf32>
    %cst_104 = arith.constant 1.000000e+00 : f32
    %284 = vector.broadcast %cst_104 : f32 to vector<8x128xf32>
    %285 = arith.addf %283, %284 : vector<8x128xf32>
    %cst_105 = arith.constant 5.000000e-01 : f32
    %286 = vector.broadcast %cst_105 : f32 to vector<8x128xf32>
    %287 = arith.mulf %286, %285 : vector<8x128xf32>
    %288 = vector.extract_strided_slice %266 {offsets = [0, 256], sizes = [8, 128], strides = [1, 1]} : vector<8x384xf32> to vector<8x128xf32>
    %289 = vector.extract_strided_slice %267 {offsets = [0, 256], sizes = [8, 128], strides = [1, 1]} : vector<8x384xf32> to vector<8x128xf32>
    %290 = arith.addf %289, %18 : vector<8x128xf32>
    %291 = arith.mulf %277, %290 : vector<8x128xf32>
    %292 = arith.addf %288, %291 : vector<8x128xf32>
    %293 = math.tanh %292 : vector<8x128xf32>
    %cst_106 = arith.constant 1.000000e+00 : f32
    %294 = vector.broadcast %cst_106 : f32 to vector<8x128xf32>
    %295 = arith.subf %294, %287 : vector<8x128xf32>
    %296 = arith.mulf %295, %293 : vector<8x128xf32>
    %297 = arith.mulf %287, %263 : vector<8x128xf32>
    %298 = arith.addf %296, %297 : vector<8x128xf32>
    %299 = vector.extract_strided_slice %298 {offsets = [0, 0], sizes = [8, 32], strides = [1, 1]} : vector<8x128xf32> to vector<8x32xf32>
    %c56_107 = arith.constant 56 : index
    %c0_108 = arith.constant 0 : index
    %300 = vector.load %arg5[%c56_107, %c0_108] : memref<64x32xf32, #tpu.memory_space<vmem>>, vector<8x32xf32>
    tpu.vector_store %arg5[%c56_107, %c0_108], %299 {strides = array<i32>} : memref<64x32xf32, #tpu.memory_space<vmem>>, vector<8x32xf32>,
    %c0_109 = arith.constant 0 : index
    %c0_110 = arith.constant 0 : index
    %301 = vector.load %arg5[%c0_109, %c0_110] : memref<64x32xf32, #tpu.memory_space<vmem>>, vector<64x32xf32>
    %cst_111 = arith.constant dense<0.000000e+00> : vector<64x32xf32>
    %302 = tpu.matmul %301, %1, %cst_111 {dimension_numbers = #tpu.dot_dimension_numbers<[1], [0], [0], [1], [0, 0, 1, 1], [], []>} : vector<64x32xf32>, vector<32x32xf32>, vector<64x32xf32> -> vector<64x32xf32>
    %303 = vector.broadcast %7 : vector<1x32xf32> to vector<64x32xf32>
    %304 = arith.addf %302, %303 : vector<64x32xf32>
    %cst_112 = arith.constant 0.000000e+00 : f32
    %305 = vector.broadcast %cst_112 : f32 to vector<64x32xf32>
    %306 = arith.maximumf %304, %305 : vector<64x32xf32>
    %cst_113 = arith.constant dense<0.000000e+00> : vector<64x128xf32>
    %307 = tpu.matmul %306, %2, %cst_113 {dimension_numbers = #tpu.dot_dimension_numbers<[1], [0], [0], [1], [0, 0, 1, 1], [], []>} : vector<64x32xf32>, vector<32x128xf32>, vector<64x128xf32> -> vector<64x128xf32>
    %308 = vector.broadcast %8 : vector<1x128xf32> to vector<64x128xf32>
    %309 = arith.addf %307, %308 : vector<64x128xf32>
    %310 = tpu.iota {dimensions = array<i32: 1>} : vector<64x128xi32>
    %c4_i32 = arith.constant 4 : i32
    %311 = vector.broadcast %c4_i32 : i32 to vector<64x128xi32>
    %312 = arith.cmpi slt, %310, %311 : vector<64x128xi32>
    %cst_114 = arith.constant 0.000000e+00 : f32
    %313 = vector.broadcast %cst_114 : f32 to vector<64x128xf32>
    %314 = arith.maximumf %309, %313 : vector<64x128xf32>
    %315 = vector.broadcast %cst_114 : f32 to vector<64x128xf32>
    %316 = arith.subf %309, %315 : vector<64x128xf32>
    %317 = arith.cmpf one, %316, %316 : vector<64x128xf32>
    %318 = vector.broadcast %cst_114 : f32 to vector<64x128xf32>
    %319 = arith.addf %309, %318 : vector<64x128xf32>
    %320 = math.absf %316 : vector<64x128xf32>
    %cst_115 = arith.constant 0.000000e+00 : f32
    %321 = vector.broadcast %cst_115 : f32 to vector<64x128xf32>
    %322 = arith.subf %321, %320 : vector<64x128xf32>
    %323 = math.exp %322 : vector<64x128xf32>
    %324 = math.log1p %323 : vector<64x128xf32>
    %325 = arith.addf %314, %324 : vector<64x128xf32>
    %326 = arith.select %317, %319, %325 : vector<64x128xi1>, vector<64x128xf32>
    %cst_116 = arith.constant 9.99999974E-5 : f32
    %327 = vector.broadcast %cst_116 : f32 to vector<64x128xf32>
    %328 = arith.addf %327, %326 : vector<64x128xf32>
    %329 = arith.select %312, %309, %328 : vector<64x128xi1>, vector<64x128xf32>
    %c0_117 = arith.constant 0 : index
    %c0_118 = arith.constant 0 : index
    %330 = vector.load %arg3[%c0_117, %c0_118] : memref<64x128xf32, #tpu.memory_space<vmem>>, vector<64x128xf32>
    tpu.vector_store %arg3[%c0_117, %c0_118], %329 {strides = array<i32>} : memref<64x128xf32, #tpu.memory_space<vmem>>, vector<64x128xf32>,
    return
  }
  func.func @transform_0(%arg0: i32) -> (i32, i32) {
    %c0_i32 = arith.constant 0 : i32
    %c0_i32_0 = arith.constant 0 : i32
    %c0_i32_1 = arith.constant 0 : i32
    return %c0_i32, %c0_i32_0 : i32, i32
  }
  func.func @transform_1(%arg0: i32) -> (i32, i32) {
    %c0_i32 = arith.constant 0 : i32
    %c0_i32_0 = arith.constant 0 : i32
    %c0_i32_1 = arith.constant 0 : i32
    return %c0_i32, %c0_i32_0 : i32, i32
  }
  func.func @transform_2(%arg0: i32) -> (i32, i32) {
    %c0_i32 = arith.constant 0 : i32
    %c0_i32_0 = arith.constant 0 : i32
    %c0_i32_1 = arith.constant 0 : i32
    return %c0_i32, %c0_i32_0 : i32, i32
  }
}

</mosaic_0001>

<llo_original>
// kernel: rnn_policy_forward.1
$region0: #{rnn_policy_forward.1}
  #allocation0 [shape = 'u32[]', space=smem, size = 0x4, offset = 0x4, fixed_abs, tag = 'smem constant byte address 0x4 - core index']
  #allocation1 [shape = 'u32[144,128]{1,0:T(1,128)}', space=vmem, size = 0x12000, scoped, tag = 'internal scratch']
  #allocation2 [shape = 'f32[64,384]{1,0:T(8,128)}', space=vmem, size = 0x18000, scoped, tag = 'scratch operand']
  #allocation3 [shape = 'f32[64,32]{1,0:T(8,128)}', space=vmem, size = 0x8000, scoped, tag = 'scratch operand']
  %s0 = inlined_call_operand.vmem [shape: f32[64,32], index: 0, kind: input, shape index: {}]
  %s1 = inlined_call_operand.vmem [shape: f32[112,384], index: 1, kind: input, shape index: {}]
  %s2 = inlined_call_operand.vmem [shape: f32[64,128], index: 2, kind: output, shape index: {}]
  %s3 = sld [smem:[#allocation0]]
  $region18: #{rnn_policy_forward.1} parent=0
    _
  %s5 = ssub.s32 1, %s3
  %s6 = scalar_select 0, %s5, %s3
  // Predicated region
  $region2: #{rnn_policy_forward.1} parent=0 // pred_check
    _
  $region3: #{rnn_policy_forward.1} parent=0 // pred_check_branch
    %8 = sbr.rel (0) target = $region5
  $region4: #{rnn_policy_forward.1} parent=0 // pred_region
    _
  $region5: #{rnn_policy_forward.1} parent=0 // pred_fallthru
    _
  // Predicated region
  $region6: #{rnn_policy_forward.1} parent=0 // pred_check
    _
  $region7: #{rnn_policy_forward.1} parent=0 // pred_check_branch
    %10 = sbr.rel (0) target = $region9
  $region8: #{rnn_policy_forward.1} parent=0 // pred_region
    _
  $region9: #{rnn_policy_forward.1} parent=0 // pred_fallthru
    _
  %v11 = vld [vmem:[%s1] sm:$0xff]
  %v12 = vld [vmem:[%s1 + $0x18] sm:$0xff]
  %v13 = vld [vmem:[%s1 + $0x30] sm:$0xff]
  %v14 = vld [vmem:[%s1 + $0x48] sm:$0xff]
  %v15 = vld [vmem:[%s1 + $0x8] sm:$0xff]
  %v16 = vld [vmem:[%s1 + $0x20] sm:$0xff]
  %v17 = vld [vmem:[%s1 + $0x38] sm:$0xff]
  %v18 = vld [vmem:[%s1 + $0x50] sm:$0xff]
  %v19 = vld [vmem:[%s1 + $0x60] sm:$0xff]
  %v20 = vld [vmem:[%s1 + $0x68] sm:$0xff]
  %v21 = vld [vmem:[%s1 + $0x70] sm:$0xff]
  %v22 = vld [vmem:[%s1 + $0x78] sm:$0xff]
  %v23 = vld [vmem:[%s1 + $0x80] sm:$0xff]
  %v24 = vld [vmem:[%s1 + $0x88] sm:$0xff]
  %v25 = vld [vmem:[%s1 + $0x90] sm:$0xff]
  %v26 = vld [vmem:[%s1 + $0x98] sm:$0xff]
  %v27 = vld [vmem:[%s1 + $0xa0] sm:$0xff]
  %v28 = vld [vmem:[%s1 + $0xa8] sm:$0xff]
  %v29 = vld [vmem:[%s1 + $0xb0] sm:$0xff]
  %v30 = vld [vmem:[%s1 + $0xb8] sm:$0xff]
  %v31 = vld [vmem:[%s1 + $0xc0] sm:$0xff]
  %v32 = vld [vmem:[%s1 + $0xc8] sm:$0xff]
  %v33 = vld [vmem:[%s1 + $0xd0] sm:$0xff]
  %v34 = vld [vmem:[%s1 + $0xd8] sm:$0xff]
  %v35 = vld [vmem:[%s1 + $0xe0] sm:$0xff]
  %v36 = vld [vmem:[%s1 + $0xe8] sm:$0xff]
  %v37 = vld [vmem:[%s1 + $0xf0] sm:$0xff]
  %v38 = vld [vmem:[%s1 + $0xf8] sm:$0xff]
  %v39 = vld [vmem:[%s1 + $0x100] sm:$0xff]
  %v40 = vld [vmem:[%s1 + $0x108] sm:$0xff]
  %v41 = vld [vmem:[%s1 + $0x110] sm:$0xff]
  %v42 = vld [vmem:[%s1 + $0x118] sm:$0xff]
  %s43 = scalar_lea.vmem %s1, 288
  %v44 = vld [vmem:[%s43] ss:$8 sm:$0x7]
  %v45 = vld [vmem:[%s1 + $0x138] ss:$0 sm:$0xff]
  %v46 = vld [vmem:[%s1 + $0x140] ss:$0 sm:$0xff]
  %v47 = vld [vmem:[%s1 + $0x148] ss:$0 sm:$0xff]
  %v48 = vld [vmem:[%s0] sm:$0xff]
  %v49 = vld [vmem:[%s0 + $0x8] sm:$0xff]
  %v50 = vld [vmem:[%s0 + $0x10] sm:$0xff]
  %v51 = vld [vmem:[%s0 + $0x18] sm:$0xff]
  %v52 = vld [vmem:[%s0 + $0x20] sm:$0xff]
  %v53 = vld [vmem:[%s0 + $0x28] sm:$0xff]
  %v54 = vld [vmem:[%s0 + $0x30] sm:$0xff]
  %v55 = vld [vmem:[%s0 + $0x38] sm:$0xff]
  %vm56 = vcmask 261120
  %v58 = vsel %vm56, %v48, 0
  %v61 = vsel %vm56, %v49, 0
  %v64 = vsel %vm56, %v50, 0
  %v67 = vsel %vm56, %v51, 0
  %v70 = vsel %vm56, %v52, 0
  %v73 = vsel %vm56, %v53, 0
  %v76 = vsel %vm56, %v54, 0
  %v79 = vsel %vm56, %v55, 0
  %81 = vmatprep.subr.mxu0 0.0
  %82 = vmatpush1.msra.mxu0 %v11
  %83 = vmatprep.subr.mxu0 0.0
  %84 = vmatpush1.msra.mxu0 %v12
  %85 = vmatprep.subr.mxu0 0.0
  %86 = vmatpush1.msra.mxu0 %v13
  %87 = vmatprep.subr.mxu0 0.0
  %88 = vmatpush1.msra.mxu0 %v14
  %89 = vmatprep.subr.mxu0 0.0
  %90 = vmatpush1.msra.mxu0 0.0
  %91 = vmatprep.subr.mxu0 0.0
  %92 = vmatpush1.msra.mxu0 0.0
  %93 = vmatprep.subr.mxu0 0.0
  %94 = vmatpush1.msra.mxu0 0.0
  %95 = vmatprep.subr.mxu0 0.0
  %96 = vmatpush1.msra.mxu0 0.0
  %97 = vmatprep.subr.mxu0 0.0
  %98 = vmatpush1.msra.mxu0 0.0
  %99 = vmatprep.subr.mxu0 0.0
  %100 = vmatpush1.msra.mxu0 0.0
  %101 = vmatprep.subr.mxu0 0.0
  %102 = vmatpush1.msra.mxu0 0.0
  %103 = vmatprep.subr.mxu0 0.0
  %104 = vmatpush1.msra.mxu0 0.0
  %105 = vmatprep.subr.mxu0 0.0
  %106 = vmatpush1.msra.mxu0 0.0
  %107 = vmatprep.subr.mxu0 0.0
  %108 = vmatpush1.msra.mxu0 0.0
  %109 = vmatprep.subr.mxu0 0.0
  %110 = vmatpush1.msra.mxu0 0.0
  %111 = vmatprep.subr.mxu0 0.0
  %112 = vmatpush1.msra.mxu0 0.0
  %113 = vmatprep.subr.mxu0 0.0
  %114 = vmatpush1.msra.mxu0 0.0
  %115 = vmatprep.subr.mxu0 0.0
  %116 = vmatpush1.msra.mxu0 0.0
  %117 = vmatprep.subr.mxu0 0.0
  %118 = vmatpush1.msra.mxu0 0.0
  %119 = vmatprep.subr.mxu0 0.0
  %120 = vmatpush1.msra.mxu0 0.0
  %121 = vmatprep.subr.mxu0 0.0
  %122 = vmatpush1.msra.mxu0 0.0
  %123 = vmatprep.subr.mxu0 0.0
  %124 = vmatpush1.msra.mxu0 0.0
  %125 = vmatprep.subr.mxu0 0.0
  %126 = vmatpush1.msra.mxu0 0.0
  %127 = vmatprep.subr.mxu0 0.0
  %128 = vmatpush1.msra.mxu0 0.0
  %129 = vmatprep.subr.mxu0 0.0
  %130 = vmatpush1.msra.mxu0 0.0
  %131 = vmatprep.subr.mxu0 0.0
  %132 = vmatpush1.msra.mxu0 0.0
  %133 = vmatprep.subr.mxu0 0.0
  %134 = vmatpush1.msra.mxu0 0.0
  %135 = vmatprep.subr.mxu0 0.0
  %136 = vmatpush1.msra.mxu0 0.0
  %137 = vmatprep.subr.mxu0 0.0
  %138 = vmatpush1.msra.mxu0 0.0
  %139 = vmatprep.subr.mxu0 0.0
  %140 = vmatpush1.msra.mxu0 0.0
  %141 = vmatprep.subr.mxu0 0.0
  %142 = vmatpush1.msra.mxu0 0.0
  %143 = vmatprep.subr.mxu0 0.0
  %144 = vmatpush1.msra.mxu0 0.0
  %145 = vmatprep.mubr.f32.mxu0 0.0
  %146 = vmatmul.mubr.f32.gmra.mrb[0].mxu0 %v58
  %v147 = vpop.f32.mrb[0].mxu0
  %v148 = vadd.f32 0.0, %v147
  %v149 = vpop.f32.mrb[0].mxu0
  %150 = vmatprep.mubr.f32.mxu0 0.0
  %151 = vmatmul.mubr.f32.gmra.mrb[0].mxu0 %v61
  %v152 = vpop.f32.mrb[0].mxu0
  %v153 = vadd.f32 0.0, %v152
  %v154 = vpop.f32.mrb[0].mxu0
  %155 = vmatprep.mubr.f32.mxu0 0.0
  %156 = vmatmul.mubr.f32.gmra.mrb[0].mxu0 %v64
  %v157 = vpop.f32.mrb[0].mxu0
  %v158 = vadd.f32 0.0, %v157
  %v159 = vpop.f32.mrb[0].mxu0
  %160 = vmatprep.mubr.f32.mxu0 0.0
  %161 = vmatmul.mubr.f32.gmra.mrb[0].mxu0 %v67
  %v162 = vpop.f32.mrb[0].mxu0
  %v163 = vadd.f32 0.0, %v162
  %v164 = vpop.f32.mrb[0].mxu0
  %165 = vmatprep.mubr.f32.mxu0 0.0
  %166 = vmatmul.mubr.f32.gmra.mrb[0].mxu0 %v70
  %v167 = vpop.f32.mrb[0].mxu0
  %v168 = vadd.f32 0.0, %v167
  %v169 = vpop.f32.mrb[0].mxu0
  %170 = vmatprep.mubr.f32.mxu0 0.0
  %171 = vmatmul.mubr.f32.gmra.mrb[0].mxu0 %v73
  %v172 = vpop.f32.mrb[0].mxu0
  %v173 = vadd.f32 0.0, %v172
  %v174 = vpop.f32.mrb[0].mxu0
  %175 = vmatprep.mubr.f32.mxu0 0.0
  %176 = vmatmul.mubr.f32.gmra.mrb[0].mxu0 %v76
  %v177 = vpop.f32.mrb[0].mxu0
  %v178 = vadd.f32 0.0, %v177
  %v179 = vpop.f32.mrb[0].mxu0
  %180 = vmatprep.mubr.f32.mxu0 0.0
  %181 = vmatmul.mubr.f32.gmra.mrb[0].mxu0 %v79
  %v182 = vpop.f32.mrb[0].mxu0
  %v183 = vadd.f32 0.0, %v182
  %v184 = vpop.f32.mrb[0].mxu0
  %185 = vdwg.mxu0
  %v186 = vmax.f32 %v148, 0.0
  %v187 = vmax.f32 %v153, 0.0
  %v188 = vmax.f32 %v158, 0.0
  %v189 = vmax.f32 %v163, 0.0
  %v190 = vmax.f32 %v168, 0.0
  %v191 = vmax.f32 %v173, 0.0
  %v192 = vmax.f32 %v178, 0.0
  %v193 = vmax.f32 %v183, 0.0
  %v195 = vlaneseq
  %v196 = vshrl.u32 %v195, 7
  %v197 = vsub.s32 0, %v196
  %v198 = vrot.slane %v44, %v197
  %v199 = vlaneseq
  %v200 = vshrl.u32 %v199, 7
  %v201 = vsub.s32 1, %v200
  %v202 = vrot.slane %v44, %v201
  %v203 = vlaneseq
  %v204 = vshrl.u32 %v203, 7
  %v205 = vsub.s32 2, %v204
  %v206 = vrot.slane %v44, %v205
  %v211 = vsel %vm56, %v186, 0
  %v214 = vsel %vm56, %v187, 0
  %v217 = vsel %vm56, %v188, 0
  %v220 = vsel %vm56, %v189, 0
  %v223 = vsel %vm56, %v190, 0
  %v226 = vsel %vm56, %v191, 0
  %v229 = vsel %vm56, %v192, 0
  %v232 = vsel %vm56, %v193, 0
  %234 = vmatprep.subr.mxu0 %v20
  %235 = vmatpush1.msra.mxu0 %v19
  %236 = vmatprep.subr.mxu0 %v23
  %237 = vmatpush1.msra.mxu0 %v22
  %238 = vmatprep.subr.mxu0 %v26
  %239 = vmatpush1.msra.mxu0 %v25
  %240 = vmatprep.subr.mxu0 %v29
  %241 = vmatpush1.msra.mxu0 %v28
  %242 = vmatprep.subr.mxu0 0.0
  %243 = vmatpush1.msra.mxu0 0.0
  %244 = vmatprep.subr.mxu0 0.0
  %245 = vmatpush1.msra.mxu0 0.0
  %246 = vmatprep.subr.mxu0 0.0
  %247 = vmatpush1.msra.mxu0 0.0
  %248 = vmatprep.subr.mxu0 0.0
  %249 = vmatpush1.msra.mxu0 0.0
  %250 = vmatprep.subr.mxu0 0.0
  %251 = vmatpush1.msra.mxu0 0.0
  %252 = vmatprep.subr.mxu0 0.0
  %253 = vmatpush1.msra.mxu0 0.0
  %254 = vmatprep.subr.mxu0 0.0
  %255 = vmatpush1.msra.mxu0 0.0
  %256 = vmatprep.subr.mxu0 0.0
  %257 = vmatpush1.msra.mxu0 0.0
  %258 = vmatprep.subr.mxu0 0.0
  %259 = vmatpush1.msra.mxu0 0.0
  %260 = vmatprep.subr.mxu0 0.0
  %261 = vmatpush1.msra.mxu0 0.0
  %262 = vmatprep.subr.mxu0 0.0
  %263 = vmatpush1.msra.mxu0 0.0
  %264 = vmatprep.subr.mxu0 0.0
  %265 = vmatpush1.msra.mxu0 0.0
  %266 = vmatprep.subr.mxu0 0.0
  %267 = vmatpush1.msra.mxu0 0.0
  %268 = vmatprep.subr.mxu0 0.0
  %269 = vmatpush1.msra.mxu0 0.0
  %270 = vmatprep.subr.mxu0 0.0
  %271 = vmatpush1.msra.mxu0 0.0
  %272 = vmatprep.subr.mxu0 0.0
  %273 = vmatpush1.msra.mxu0 0.0
  %274 = vmatprep.subr.mxu0 0.0
  %275 = vmatpush1.msra.mxu0 0.0
  %276 = vmatprep.subr.mxu0 0.0
  %277 = vmatpush1.msra.mxu0 0.0
  %278 = vmatprep.subr.mxu0 0.0
  %279 = vmatpush1.msra.mxu0 0.0
  %280 = vmatprep.subr.mxu0 0.0
  %281 = vmatpush1.msra.mxu0 0.0
  %282 = vmatprep.subr.mxu0 0.0
  %283 = vmatpush1.msra.mxu0 0.0
  %284 = vmatprep.subr.mxu0 0.0
  %285 = vmatpush1.msra.mxu0 0.0
  %286 = vmatprep.subr.mxu0 0.0
  %287 = vmatpush1.msra.mxu0 0.0
  %288 = vmatprep.subr.mxu0 0.0
  %289 = vmatpush1.msra.mxu0 0.0
  %290 = vmatprep.subr.mxu0 0.0
  %291 = vmatpush1.msra.mxu0 0.0
  %292 = vmatprep.subr.mxu0 0.0
  %293 = vmatpush1.msra.mxu0 0.0
  %294 = vmatprep.subr.mxu0 0.0
  %295 = vmatpush1.msra.mxu0 0.0
  %296 = vmatprep.subr.mxu0 0.0
  %297 = vmatpush1.msra.mxu0 0.0
  %298 = vmatprep.mubr.f32.mxu0 0.0
  %299 = vmatmul.mubr.f32.gmra.mrb[0].mxu0 %v211
  %v300 = vpop.f32.mrb[0].mxu0
  %v301 = vadd.f32 %v198, %v300
  %v302 = vpop.f32.mrb[0].mxu0
  %v303 = vadd.f32 %v202, %v302
  %304 = vmatprep.mubr.f32.mxu0 0.0
  %305 = vmatmul.mubr.f32.gmra.mrb[0].mxu0 %v214
  %v306 = vpop.f32.mrb[0].mxu0
  %v307 = vadd.f32 %v198, %v306
  %v308 = vpop.f32.mrb[0].mxu0
  %v309 = vadd.f32 %v202, %v308
  %310 = vmatprep.mubr.f32.mxu0 0.0
  %311 = vmatmul.mubr.f32.gmra.mrb[0].mxu0 %v217
  %v312 = vpop.f32.mrb[0].mxu0
  %v313 = vadd.f32 %v198, %v312
  %v314 = vpop.f32.mrb[0].mxu0
  %v315 = vadd.f32 %v202, %v314
  %316 = vmatprep.mubr.f32.mxu0 0.0
  %317 = vmatmul.mubr.f32.gmra.mrb[0].mxu0 %v220
  %v318 = vpop.f32.mrb[0].mxu0
  %v319 = vadd.f32 %v198, %v318
  %v320 = vpop.f32.mrb[0].mxu0
  %v321 = vadd.f32 %v202, %v320
  %322 = vmatprep.mubr.f32.mxu0 0.0
  %323 = vmatmul.mubr.f32.gmra.mrb[0].mxu0 %v223
  %v324 = vpop.f32.mrb[0].mxu0
  %v325 = vadd.f32 %v198, %v324
  %v326 = vpop.f32.mrb[0].mxu0
  %v327 = vadd.f32 %v202, %v326
  %328 = vmatprep.mubr.f32.mxu0 0.0
  %329 = vmatmul.mubr.f32.gmra.mrb[0].mxu0 %v226
  %v330 = vpop.f32.mrb[0].mxu0
  %v331 = vadd.f32 %v198, %v330
  %v332 = vpop.f32.mrb[0].mxu0
  %v333 = vadd.f32 %v202, %v332
  %334 = vmatprep.mubr.f32.mxu0 0.0
  %335 = vmatmul.mubr.f32.gmra.mrb[0].mxu0 %v229
  %v336 = vpop.f32.mrb[0].mxu0
  %v337 = vadd.f32 %v198, %v336
  %v338 = vpop.f32.mrb[0].mxu0
  %v339 = vadd.f32 %v202, %v338
  %340 = vmatprep.mubr.f32.mxu0 0.0
  %341 = vmatmul.mubr.f32.gmra.mrb[0].mxu0 %v232
  %v342 = vpop.f32.mrb[0].mxu0
  %v343 = vadd.f32 %v198, %v342
  %v344 = vpop.f32.mrb[0].mxu0
  %v345 = vadd.f32 %v202, %v344
  %346 = vdwg.mxu0
  %347 = vmatprep.subr.mxu0 0.0
  %348 = vmatpush1.msra.mxu0 %v21
  %349 = vmatprep.subr.mxu0 0.0
  %350 = vmatpush1.msra.mxu0 %v24
  %351 = vmatprep.subr.mxu0 0.0
  %352 = vmatpush1.msra.mxu0 %v27
  %353 = vmatprep.subr.mxu0 0.0
  %354 = vmatpush1.msra.mxu0 %v30
  %355 = vmatprep.subr.mxu0 0.0
  %356 = vmatpush1.msra.mxu0 0.0
  %357 = vmatprep.subr.mxu0 0.0
  %358 = vmatpush1.msra.mxu0 0.0
  %359 = vmatprep.subr.mxu0 0.0
  %360 = vmatpush1.msra.mxu0 0.0
  %361 = vmatprep.subr.mxu0 0.0
  %362 = vmatpush1.msra.mxu0 0.0
  %363 = vmatprep.subr.mxu0 0.0
  %364 = vmatpush1.msra.mxu0 0.0
  %365 = vmatprep.subr.mxu0 0.0
  %366 = vmatpush1.msra.mxu0 0.0
  %367 = vmatprep.subr.mxu0 0.0
  %368 = vmatpush1.msra.mxu0 0.0
  %369 = vmatprep.subr.mxu0 0.0
  %370 = vmatpush1.msra.mxu0 0.0
  %371 = vmatprep.subr.mxu0 0.0
  %372 = vmatpush1.msra.mxu0 0.0
  %373 = vmatprep.subr.mxu0 0.0
  %374 = vmatpush1.msra.mxu0 0.0
  %375 = vmatprep.subr.mxu0 0.0
  %376 = vmatpush1.msra.mxu0 0.0
  %377 = vmatprep.subr.mxu0 0.0
  %378 = vmatpush1.msra.mxu0 0.0
  %379 = vmatprep.subr.mxu0 0.0
  %380 = vmatpush1.msra.mxu0 0.0
  %381 = vmatprep.subr.mxu0 0.0
  %382 = vmatpush1.msra.mxu0 0.0
  %383 = vmatprep.subr.mxu0 0.0
  %384 = vmatpush1.msra.mxu0 0.0
  %385 = vmatprep.subr.mxu0 0.0
  %386 = vmatpush1.msra.mxu0 0.0
  %387 = vmatprep.subr.mxu0 0.0
  %388 = vmatpush1.msra.mxu0 0.0
  %389 = vmatprep.subr.mxu0 0.0
  %390 = vmatpush1.msra.mxu0 0.0
  %391 = vmatprep.subr.mxu0 0.0
  %392 = vmatpush1.msra.mxu0 0.0
  %393 = vmatprep.subr.mxu0 0.0
  %394 = vmatpush1.msra.mxu0 0.0
  %395 = vmatprep.subr.mxu0 0.0
  %396 = vmatpush1.msra.mxu0 0.0
  %397 = vmatprep.subr.mxu0 0.0
  %398 = vmatpush1.msra.mxu0 0.0
  %399 = vmatprep.subr.mxu0 0.0
  %400 = vmatpush1.msra.mxu0 0.0
  %401 = vmatprep.subr.mxu0 0.0
  %402 = vmatpush1.msra.mxu0 0.0
  %403 = vmatprep.subr.mxu0 0.0
  %404 = vmatpush1.msra.mxu0 0.0
  %405 = vmatprep.subr.mxu0 0.0
  %406 = vmatpush1.msra.mxu0 0.0
  %407 = vmatprep.subr.mxu0 0.0
  %408 = vmatpush1.msra.mxu0 0.0
  %409 = vmatprep.subr.mxu0 0.0
  %410 = vmatpush1.msra.mxu0 0.0
  %411 = vmatprep.mubr.f32.mxu0 0.0
  %412 = vmatmul.mubr.f32.gmra.mrb[0].mxu0 %v211
  %v413 = vpop.f32.mrb[0].mxu0
  %v414 = vadd.f32 %v206, %v413
  %v415 = vpop.f32.mrb[0].mxu0
  %416 = vmatprep.mubr.f32.mxu0 0.0
  %417 = vmatmul.mubr.f32.gmra.mrb[0].mxu0 %v214
  %v418 = vpop.f32.mrb[0].mxu0
  %v419 = vadd.f32 %v206, %v418
  %v420 = vpop.f32.mrb[0].mxu0
  %421 = vmatprep.mubr.f32.mxu0 0.0
  %422 = vmatmul.mubr.f32.gmra.mrb[0].mxu0 %v217
  %v423 = vpop.f32.mrb[0].mxu0
  %v424 = vadd.f32 %v206, %v423
  %v425 = vpop.f32.mrb[0].mxu0
  %426 = vmatprep.mubr.f32.mxu0 0.0
  %427 = vmatmul.mubr.f32.gmra.mrb[0].mxu0 %v220
  %v428 = vpop.f32.mrb[0].mxu0
  %v429 = vadd.f32 %v206, %v428
  %v430 = vpop.f32.mrb[0].mxu0
  %431 = vmatprep.mubr.f32.mxu0 0.0
  %432 = vmatmul.mubr.f32.gmra.mrb[0].mxu0 %v223
  %v433 = vpop.f32.mrb[0].mxu0
  %v434 = vadd.f32 %v206, %v433
  %v435 = vpop.f32.mrb[0].mxu0
  %436 = vmatprep.mubr.f32.mxu0 0.0
  %437 = vmatmul.mubr.f32.gmra.mrb[0].mxu0 %v226
  %v438 = vpop.f32.mrb[0].mxu0
  %v439 = vadd.f32 %v206, %v438
  %v440 = vpop.f32.mrb[0].mxu0
  %441 = vmatprep.mubr.f32.mxu0 0.0
  %442 = vmatmul.mubr.f32.gmra.mrb[0].mxu0 %v229
  %v443 = vpop.f32.mrb[0].mxu0
  %v444 = vadd.f32 %v206, %v443
  %v445 = vpop.f32.mrb[0].mxu0
  %446 = vmatprep.mubr.f32.mxu0 0.0
  %447 = vmatmul.mubr.f32.gmra.mrb[0].mxu0 %v232
  %v448 = vpop.f32.mrb[0].mxu0
  %v449 = vadd.f32 %v206, %v448
  %v450 = vpop.f32.mrb[0].mxu0
  %451 = vdwg.mxu0
  %452 = vst [vmem:[#allocation2] sm:$0xff] %v301
  %453 = vst [vmem:[#allocation2 + $0x8] sm:$0xff] %v303
  %454 = vst [vmem:[#allocation2 + $0x10] sm:$0xff] %v414
  %455 = vst [vmem:[#allocation2 + $0x18] sm:$0xff] %v307
  %456 = vst [vmem:[#allocation2 + $0x20] sm:$0xff] %v309
  %457 = vst [vmem:[#allocation2 + $0x28] sm:$0xff] %v419
  %458 = vst [vmem:[#allocation2 + $0x30] sm:$0xff] %v313
  %459 = vst [vmem:[#allocation2 + $0x38] sm:$0xff] %v315
  %460 = vst [vmem:[#allocation2 + $0x40] sm:$0xff] %v424
  %461 = vst [vmem:[#allocation2 + $0x48] sm:$0xff] %v319
  %462 = vst [vmem:[#allocation2 + $0x50] sm:$0xff] %v321
  %463 = vst [vmem:[#allocation2 + $0x58] sm:$0xff] %v429
  %464 = vst [vmem:[#allocation2 + $0x60] sm:$0xff] %v325
  %465 = vst [vmem:[#allocation2 + $0x68] sm:$0xff] %v327
  %466 = vst [vmem:[#allocation2 + $0x70] sm:$0xff] %v434
  %467 = vst [vmem:[#allocation2 + $0x78] sm:$0xff] %v331
  %468 = vst [vmem:[#allocation2 + $0x80] sm:$0xff] %v333
  %469 = vst [vmem:[#allocation2 + $0x88] sm:$0xff] %v439
  %470 = vst [vmem:[#allocation2 + $0x90] sm:$0xff] %v337
  %471 = vst [vmem:[#allocation2 + $0x98] sm:$0xff] %v339
  %472 = vst [vmem:[#allocation2 + $0xa0] sm:$0xff] %v444
  %473 = vst [vmem:[#allocation2 + $0xa8] sm:$0xff] %v343
  %474 = vst [vmem:[#allocation2 + $0xb0] sm:$0xff] %v345
  %475 = vst [vmem:[#allocation2 + $0xb8] sm:$0xff] %v449
  %v476 = vld [vmem:[#allocation2] sm:$0xff]
  %v477 = vld [vmem:[#allocation2 + $0x8] sm:$0xff]
  %v478 = vld [vmem:[#allocation2 + $0x10] sm:$0xff]
  %v480 = vsel %vm56, 0.0, 0
  %482 = vmatprep.subr.mxu0 %v32
  %483 = vmatpush1.msra.mxu0 %v31
  %484 = vmatprep.subr.mxu0 %v35
  %485 = vmatpush1.msra.mxu0 %v34
  %486 = vmatprep.subr.mxu0 %v38
  %487 = vmatpush1.msra.mxu0 %v37
  %488 = vmatprep.subr.mxu0 %v41
  %489 = vmatpush1.msra.mxu0 %v40
  %490 = vmatprep.subr.mxu0 0.0
  %491 = vmatpush1.msra.mxu0 0.0
  %492 = vmatprep.subr.mxu0 0.0
  %493 = vmatpush1.msra.mxu0 0.0
  %494 = vmatprep.subr.mxu0 0.0
  %495 = vmatpush1.msra.mxu0 0.0
  %496 = vmatprep.subr.mxu0 0.0
  %497 = vmatpush1.msra.mxu0 0.0
  %498 = vmatprep.subr.mxu0 0.0
  %499 = vmatpush1.msra.mxu0 0.0
  %500 = vmatprep.subr.mxu0 0.0
  %501 = vmatpush1.msra.mxu0 0.0
  %502 = vmatprep.subr.mxu0 0.0
  %503 = vmatpush1.msra.mxu0 0.0
  %504 = vmatprep.subr.mxu0 0.0
  %505 = vmatpush1.msra.mxu0 0.0
  %506 = vmatprep.subr.mxu0 0.0
  %507 = vmatpush1.msra.mxu0 0.0
  %508 = vmatprep.subr.mxu0 0.0
  %509 = vmatpush1.msra.mxu0 0.0
  %510 = vmatprep.subr.mxu0 0.0
  %511 = vmatpush1.msra.mxu0 0.0
  %512 = vmatprep.subr.mxu0 0.0
  %513 = vmatpush1.msra.mxu0 0.0
  %514 = vmatprep.subr.mxu0 0.0
  %515 = vmatpush1.msra.mxu0 0.0
  %516 = vmatprep.subr.mxu0 0.0
  %517 = vmatpush1.msra.mxu0 0.0
  %518 = vmatprep.subr.mxu0 0.0
  %519 = vmatpush1.msra.mxu0 0.0
  %520 = vmatprep.subr.mxu0 0.0
  %521 = vmatpush1.msra.mxu0 0.0
  %522 = vmatprep.subr.mxu0 0.0
  %523 = vmatpush1.msra.mxu0 0.0
  %524 = vmatprep.subr.mxu0 0.0
  %525 = vmatpush1.msra.mxu0 0.0
  %526 = vmatprep.subr.mxu0 0.0
  %527 = vmatpush1.msra.mxu0 0.0
  %528 = vmatprep.subr.mxu0 0.0
  %529 = vmatpush1.msra.mxu0 0.0
  %530 = vmatprep.subr.mxu0 0.0
  %531 = vmatpush1.msra.mxu0 0.0
  %532 = vmatprep.subr.mxu0 0.0
  %533 = vmatpush1.msra.mxu0 0.0
  %534 = vmatprep.subr.mxu0 0.0
  %535 = vmatpush1.msra.mxu0 0.0
  %536 = vmatprep.subr.mxu0 0.0
  %537 = vmatpush1.msra.mxu0 0.0
  %538 = vmatprep.subr.mxu0 0.0
  %539 = vmatpush1.msra.mxu0 0.0
  %540 = vmatprep.subr.mxu0 0.0
  %541 = vmatpush1.msra.mxu0 0.0
  %542 = vmatprep.subr.mxu0 0.0
  %543 = vmatpush1.msra.mxu0 0.0
  %544 = vmatprep.subr.mxu0 0.0
  %545 = vmatpush1.msra.mxu0 0.0
  %546 = vmatprep.mubr.f32.mxu0 0.0
  %547 = vmatmul.mubr.f32.gmra.mrb[0].mxu0 %v480
  %v548 = vpop.f32.mrb[0].mxu0
  %v549 = vadd.f32 0.0, %v548
  %v550 = vpop.f32.mrb[0].mxu0
  %v551 = vadd.f32 0.0, %v550
  %552 = vdwg.mxu0
  %553 = vmatprep.subr.mxu0 0.0
  %554 = vmatpush1.msra.mxu0 %v33
  %555 = vmatprep.subr.mxu0 0.0
  %556 = vmatpush1.msra.mxu0 %v36
  %557 = vmatprep.subr.mxu0 0.0
  %558 = vmatpush1.msra.mxu0 %v39
  %559 = vmatprep.subr.mxu0 0.0
  %560 = vmatpush1.msra.mxu0 %v42
  %561 = vmatprep.subr.mxu0 0.0
  %562 = vmatpush1.msra.mxu0 0.0
  %563 = vmatprep.subr.mxu0 0.0
  %564 = vmatpush1.msra.mxu0 0.0
  %565 = vmatprep.subr.mxu0 0.0
  %566 = vmatpush1.msra.mxu0 0.0
  %567 = vmatprep.subr.mxu0 0.0
  %568 = vmatpush1.msra.mxu0 0.0
  %569 = vmatprep.subr.mxu0 0.0
  %570 = vmatpush1.msra.mxu0 0.0
  %571 = vmatprep.subr.mxu0 0.0
  %572 = vmatpush1.msra.mxu0 0.0
  %573 = vmatprep.subr.mxu0 0.0
  %574 = vmatpush1.msra.mxu0 0.0
  %575 = vmatprep.subr.mxu0 0.0
  %576 = vmatpush1.msra.mxu0 0.0
  %577 = vmatprep.subr.mxu0 0.0
  %578 = vmatpush1.msra.mxu0 0.0
  %579 = vmatprep.subr.mxu0 0.0
  %580 = vmatpush1.msra.mxu0 0.0
  %581 = vmatprep.subr.mxu0 0.0
  %582 = vmatpush1.msra.mxu0 0.0
  %583 = vmatprep.subr.mxu0 0.0
  %584 = vmatpush1.msra.mxu0 0.0
  %585 = vmatprep.subr.mxu0 0.0
  %586 = vmatpush1.msra.mxu0 0.0
  %587 = vmatprep.subr.mxu0 0.0
  %588 = vmatpush1.msra.mxu0 0.0
  %589 = vmatprep.subr.mxu0 0.0
  %590 = vmatpush1.msra.mxu0 0.0
  %591 = vmatprep.subr.mxu0 0.0
  %592 = vmatpush1.msra.mxu0 0.0
  %593 = vmatprep.subr.mxu0 0.0
  %594 = vmatpush1.msra.mxu0 0.0
  %595 = vmatprep.subr.mxu0 0.0
  %596 = vmatpush1.msra.mxu0 0.0
  %597 = vmatprep.subr.mxu0 0.0
  %598 = vmatpush1.msra.mxu0 0.0
  %599 = vmatprep.subr.mxu0 0.0
  %600 = vmatpush1.msra.mxu0 0.0
  %601 = vmatprep.subr.mxu0 0.0
  %602 = vmatpush1.msra.mxu0 0.0
  %603 = vmatprep.subr.mxu0 0.0
  %604 = vmatpush1.msra.mxu0 0.0
  %605 = vmatprep.subr.mxu0 0.0
  %606 = vmatpush1.msra.mxu0 0.0
  %607 = vmatprep.subr.mxu0 0.0
  %608 = vmatpush1.msra.mxu0 0.0
  %609 = vmatprep.subr.mxu0 0.0
  %610 = vmatpush1.msra.mxu0 0.0
  %611 = vmatprep.subr.mxu0 0.0
  %612 = vmatpush1.msra.mxu0 0.0
  %613 = vmatprep.subr.mxu0 0.0
  %614 = vmatpush1.msra.mxu0 0.0
  %615 = vmatprep.subr.mxu0 0.0
  %616 = vmatpush1.msra.mxu0 0.0
  %617 = vmatprep.mubr.f32.mxu0 0.0
  %618 = vmatmul.mubr.f32.gmra.mrb[0].mxu0 %v480
  %v619 = vpop.f32.mrb[0].mxu0
  %v620 = vadd.f32 0.0, %v619
  %v621 = vpop.f32.mrb[0].mxu0
  %622 = vdwg.mxu0
  %v623 = vadd.f32 %v476, %v549
  %v624 = vmul.f32 %v623, 0.5
  %v625 = vtanh.pop %v624
  %v626 = vadd.f32 %v625, 1.0
  %v627 = vmul.f32 %v626, 0.5
  %v628 = vadd.f32 %v477, %v551
  %v629 = vmul.f32 %v628, 0.5
  %v630 = vtanh.pop %v629
  %v631 = vadd.f32 %v630, 1.0
  %v632 = vmul.f32 %v631, 0.5
  %v633 = vadd.f32 %v620, %v45
  %v634 = vmul.f32 %v627, %v633
  %v635 = vadd.f32 %v478, %v634
  %v636 = vtanh.pop %v635
  %v637 = vsub.f32 1.0, %v632
  %v638 = vmul.f32 %v637, %v636
  %v639 = vmul.f32 %v632, 0.0
  %v640 = vadd.f32 %v638, %v639
  %641 = vst.msk [vmem:[#allocation3] sm:$0xff] %vm56, %v640
  %v642 = vld [vmem:[#allocation2 + $0x18] sm:$0xff]
  %v643 = vld [vmem:[#allocation2 + $0x20] sm:$0xff]
  %v644 = vld [vmem:[#allocation2 + $0x28] sm:$0xff]
  %v646 = vsel %vm56, %v640, 0
  %648 = vmatprep.subr.mxu0 %v32
  %649 = vmatpush1.msra.mxu0 %v31
  %650 = vmatprep.subr.mxu0 %v35
  %651 = vmatpush1.msra.mxu0 %v34
  %652 = vmatprep.subr.mxu0 %v38
  %653 = vmatpush1.msra.mxu0 %v37
  %654 = vmatprep.subr.mxu0 %v41
  %655 = vmatpush1.msra.mxu0 %v40
  %656 = vmatprep.subr.mxu0 0.0
  %657 = vmatpush1.msra.mxu0 0.0
  %658 = vmatprep.subr.mxu0 0.0
  %659 = vmatpush1.msra.mxu0 0.0
  %660 = vmatprep.subr.mxu0 0.0
  %661 = vmatpush1.msra.mxu0 0.0
  %662 = vmatprep.subr.mxu0 0.0
  %663 = vmatpush1.msra.mxu0 0.0
  %664 = vmatprep.subr.mxu0 0.0
  %665 = vmatpush1.msra.mxu0 0.0
  %666 = vmatprep.subr.mxu0 0.0
  %667 = vmatpush1.msra.mxu0 0.0
  %668 = vmatprep.subr.mxu0 0.0
  %669 = vmatpush1.msra.mxu0 0.0
  %670 = vmatprep.subr.mxu0 0.0
  %671 = vmatpush1.msra.mxu0 0.0
  %672 = vmatprep.subr.mxu0 0.0
  %673 = vmatpush1.msra.mxu0 0.0
  %674 = vmatprep.subr.mxu0 0.0
  %675 = vmatpush1.msra.mxu0 0.0
  %676 = vmatprep.subr.mxu0 0.0
  %677 = vmatpush1.msra.mxu0 0.0
  %678 = vmatprep.subr.mxu0 0.0
  %679 = vmatpush1.msra.mxu0 0.0
  %680 = vmatprep.subr.mxu0 0.0
  %681 = vmatpush1.msra.mxu0 0.0
  %682 = vmatprep.subr.mxu0 0.0
  %683 = vmatpush1.msra.mxu0 0.0
  %684 = vmatprep.subr.mxu0 0.0
  %685 = vmatpush1.msra.mxu0 0.0
  %686 = vmatprep.subr.mxu0 0.0
  %687 = vmatpush1.msra.mxu0 0.0
  %688 = vmatprep.subr.mxu0 0.0
  %689 = vmatpush1.msra.mxu0 0.0
  %690 = vmatprep.subr.mxu0 0.0
  %691 = vmatpush1.msra.mxu0 0.0
  %692 = vmatprep.subr.mxu0 0.0
  %693 = vmatpush1.msra.mxu0 0.0
  %694 = vmatprep.subr.mxu0 0.0
  %695 = vmatpush1.msra.mxu0 0.0
  %696 = vmatprep.subr.mxu0 0.0
  %697 = vmatpush1.msra.mxu0 0.0
  %698 = vmatprep.subr.mxu0 0.0
  %699 = vmatpush1.msra.mxu0 0.0
  %700 = vmatprep.subr.mxu0 0.0
  %701 = vmatpush1.msra.mxu0 0.0
  %702 = vmatprep.subr.mxu0 0.0
  %703 = vmatpush1.msra.mxu0 0.0
  %704 = vmatprep.subr.mxu0 0.0
  %705 = vmatpush1.msra.mxu0 0.0
  %706 = vmatprep.subr.mxu0 0.0
  %707 = vmatpush1.msra.mxu0 0.0
  %708 = vmatprep.subr.mxu0 0.0
  %709 = vmatpush1.msra.mxu0 0.0
  %710 = vmatprep.subr.mxu0 0.0
  %711 = vmatpush1.msra.mxu0 0.0
  %712 = vmatprep.mubr.f32.mxu0 0.0
  %713 = vmatmul.mubr.f32.gmra.mrb[0].mxu0 %v646
  %v714 = vpop.f32.mrb[0].mxu0
  %v715 = vadd.f32 0.0, %v714
  %v716 = vpop.f32.mrb[0].mxu0
  %v717 = vadd.f32 0.0, %v716
  %718 = vdwg.mxu0
  %719 = vmatprep.subr.mxu0 0.0
  %720 = vmatpush1.msra.mxu0 %v33
  %721 = vmatprep.subr.mxu0 0.0
  %722 = vmatpush1.msra.mxu0 %v36
  %723 = vmatprep.subr.mxu0 0.0
  %724 = vmatpush1.msra.mxu0 %v39
  %725 = vmatprep.subr.mxu0 0.0
  %726 = vmatpush1.msra.mxu0 %v42
  %727 = vmatprep.subr.mxu0 0.0
  %728 = vmatpush1.msra.mxu0 0.0
  %729 = vmatprep.subr.mxu0 0.0
  %730 = vmatpush1.msra.mxu0 0.0
  %731 = vmatprep.subr.mxu0 0.0
  %732 = vmatpush1.msra.mxu0 0.0
  %733 = vmatprep.subr.mxu0 0.0
  %734 = vmatpush1.msra.mxu0 0.0
  %735 = vmatprep.subr.mxu0 0.0
  %736 = vmatpush1.msra.mxu0 0.0
  %737 = vmatprep.subr.mxu0 0.0
  %738 = vmatpush1.msra.mxu0 0.0
  %739 = vmatprep.subr.mxu0 0.0
  %740 = vmatpush1.msra.mxu0 0.0
  %741 = vmatprep.subr.mxu0 0.0
  %742 = vmatpush1.msra.mxu0 0.0
  %743 = vmatprep.subr.mxu0 0.0
  %744 = vmatpush1.msra.mxu0 0.0
  %745 = vmatprep.subr.mxu0 0.0
  %746 = vmatpush1.msra.mxu0 0.0
  %747 = vmatprep.subr.mxu0 0.0
  %748 = vmatpush1.msra.mxu0 0.0
  %749 = vmatprep.subr.mxu0 0.0
  %750 = vmatpush1.msra.mxu0 0.0
  %751 = vmatprep.subr.mxu0 0.0
  %752 = vmatpush1.msra.mxu0 0.0
  %753 = vmatprep.subr.mxu0 0.0
  %754 = vmatpush1.msra.mxu0 0.0
  %755 = vmatprep.subr.mxu0 0.0
  %756 = vmatpush1.msra.mxu0 0.0
  %757 = vmatprep.subr.mxu0 0.0
  %758 = vmatpush1.msra.mxu0 0.0
  %759 = vmatprep.subr.mxu0 0.0
  %760 = vmatpush1.msra.mxu0 0.0
  %761 = vmatprep.subr.mxu0 0.0
  %762 = vmatpush1.msra.mxu0 0.0
  %763 = vmatprep.subr.mxu0 0.0
  %764 = vmatpush1.msra.mxu0 0.0
  %765 = vmatprep.subr.mxu0 0.0
  %766 = vmatpush1.msra.mxu0 0.0
  %767 = vmatprep.subr.mxu0 0.0
  %768 = vmatpush1.msra.mxu0 0.0
  %769 = vmatprep.subr.mxu0 0.0
  %770 = vmatpush1.msra.mxu0 0.0
  %771 = vmatprep.subr.mxu0 0.0
  %772 = vmatpush1.msra.mxu0 0.0
  %773 = vmatprep.subr.mxu0 0.0
  %774 = vmatpush1.msra.mxu0 0.0
  %775 = vmatprep.subr.mxu0 0.0
  %776 = vmatpush1.msra.mxu0 0.0
  %777 = vmatprep.subr.mxu0 0.0
  %778 = vmatpush1.msra.mxu0 0.0
  %779 = vmatprep.subr.mxu0 0.0
  %780 = vmatpush1.msra.mxu0 0.0
  %781 = vmatprep.subr.mxu0 0.0
  %782 = vmatpush1.msra.mxu0 0.0
  %783 = vmatprep.mubr.f32.mxu0 0.0
  %784 = vmatmul.mubr.f32.gmra.mrb[0].mxu0 %v646
  %v785 = vpop.f32.mrb[0].mxu0
  %v786 = vadd.f32 0.0, %v785
  %v787 = vpop.f32.mrb[0].mxu0
  %788 = vdwg.mxu0
  %v789 = vadd.f32 %v642, %v715
  %v790 = vmul.f32 %v789, 0.5
  %v791 = vtanh.pop %v790
  %v792 = vadd.f32 %v791, 1.0
  %v793 = vmul.f32 %v792, 0.5
  %v794 = vadd.f32 %v643, %v717
  %v795 = vmul.f32 %v794, 0.5
  %v796 = vtanh.pop %v795
  %v797 = vadd.f32 %v796, 1.0
  %v798 = vmul.f32 %v797, 0.5
  %v799 = vadd.f32 %v786, %v45
  %v800 = vmul.f32 %v793, %v799
  %v801 = vadd.f32 %v644, %v800
  %v802 = vtanh.pop %v801
  %v803 = vsub.f32 1.0, %v798
  %v804 = vmul.f32 %v803, %v802
  %v805 = vmul.f32 %v798, %v640
  %v806 = vadd.f32 %v804, %v805
  %807 = vst.msk [vmem:[#allocation3 + $0x8] sm:$0xff] %vm56, %v806
  %v808 = vld [vmem:[#allocation2 + $0x30] sm:$0xff]
  %v809 = vld [vmem:[#allocation2 + $0x38] sm:$0xff]
  %v810 = vld [vmem:[#allocation2 + $0x40] sm:$0xff]
  %v812 = vsel %vm56, %v806, 0
  %814 = vmatprep.subr.mxu0 %v32
  %815 = vmatpush1.msra.mxu0 %v31
  %816 = vmatprep.subr.mxu0 %v35
  %817 = vmatpush1.msra.mxu0 %v34
  %818 = vmatprep.subr.mxu0 %v38
  %819 = vmatpush1.msra.mxu0 %v37
  %820 = vmatprep.subr.mxu0 %v41
  %821 = vmatpush1.msra.mxu0 %v40
  %822 = vmatprep.subr.mxu0 0.0
  %823 = vmatpush1.msra.mxu0 0.0
  %824 = vmatprep.subr.mxu0 0.0
  %825 = vmatpush1.msra.mxu0 0.0
  %826 = vmatprep.subr.mxu0 0.0
  %827 = vmatpush1.msra.mxu0 0.0
  %828 = vmatprep.subr.mxu0 0.0
  %829 = vmatpush1.msra.mxu0 0.0
  %830 = vmatprep.subr.mxu0 0.0
  %831 = vmatpush1.msra.mxu0 0.0
  %832 = vmatprep.subr.mxu0 0.0
  %833 = vmatpush1.msra.mxu0 0.0
  %834 = vmatprep.subr.mxu0 0.0
  %835 = vmatpush1.msra.mxu0 0.0
  %836 = vmatprep.subr.mxu0 0.0
  %837 = vmatpush1.msra.mxu0 0.0
  %838 = vmatprep.subr.mxu0 0.0
  %839 = vmatpush1.msra.mxu0 0.0
  %840 = vmatprep.subr.mxu0 0.0
  %841 = vmatpush1.msra.mxu0 0.0
  %842 = vmatprep.subr.mxu0 0.0
  %843 = vmatpush1.msra.mxu0 0.0
  %844 = vmatprep.subr.mxu0 0.0
  %845 = vmatpush1.msra.mxu0 0.0
  %846 = vmatprep.subr.mxu0 0.0
  %847 = vmatpush1.msra.mxu0 0.0
  %848 = vmatprep.subr.mxu0 0.0
  %849 = vmatpush1.msra.mxu0 0.0
  %850 = vmatprep.subr.mxu0 0.0
  %851 = vmatpush1.msra.mxu0 0.0
  %852 = vmatprep.subr.mxu0 0.0
  %853 = vmatpush1.msra.mxu0 0.0
  %854 = vmatprep.subr.mxu0 0.0
  %855 = vmatpush1.msra.mxu0 0.0
  %856 = vmatprep.subr.mxu0 0.0
  %857 = vmatpush1.msra.mxu0 0.0
  %858 = vmatprep.subr.mxu0 0.0
  %859 = vmatpush1.msra.mxu0 0.0
  %860 = vmatprep.subr.mxu0 0.0
  %861 = vmatpush1.msra.mxu0 0.0
  %862 = vmatprep.subr.mxu0 0.0
  %863 = vmatpush1.msra.mxu0 0.0
  %864 = vmatprep.subr.mxu0 0.0
  %865 = vmatpush1.msra.mxu0 0.0
  %866 = vmatprep.subr.mxu0 0.0
  %867 = vmatpush1.msra.mxu0 0.0
  %868 = vmatprep.subr.mxu0 0.0
  %869 = vmatpush1.msra.mxu0 0.0
  %870 = vmatprep.subr.mxu0 0.0
  %871 = vmatpush1.msra.mxu0 0.0
  %872 = vmatprep.subr.mxu0 0.0
  %873 = vmatpush1.msra.mxu0 0.0
  %874 = vmatprep.subr.mxu0 0.0
  %875 = vmatpush1.msra.mxu0 0.0
  %876 = vmatprep.subr.mxu0 0.0
  %877 = vmatpush1.msra.mxu0 0.0
  %878 = vmatprep.mubr.f32.mxu0 0.0
  %879 = vmatmul.mubr.f32.gmra.mrb[0].mxu0 %v812
  %v880 = vpop.f32.mrb[0].mxu0
  %v881 = vadd.f32 0.0, %v880
  %v882 = vpop.f32.mrb[0].mxu0
  %v883 = vadd.f32 0.0, %v882
  %884 = vdwg.mxu0
  %885 = vmatprep.subr.mxu0 0.0
  %886 = vmatpush1.msra.mxu0 %v33
  %887 = vmatprep.subr.mxu0 0.0
  %888 = vmatpush1.msra.mxu0 %v36
  %889 = vmatprep.subr.mxu0 0.0
  %890 = vmatpush1.msra.mxu0 %v39
  %891 = vmatprep.subr.mxu0 0.0
  %892 = vmatpush1.msra.mxu0 %v42
  %893 = vmatprep.subr.mxu0 0.0
  %894 = vmatpush1.msra.mxu0 0.0
  %895 = vmatprep.subr.mxu0 0.0
  %896 = vmatpush1.msra.mxu0 0.0
  %897 = vmatprep.subr.mxu0 0.0
  %898 = vmatpush1.msra.mxu0 0.0
  %899 = vmatprep.subr.mxu0 0.0
  %900 = vmatpush1.msra.mxu0 0.0
  %901 = vmatprep.subr.mxu0 0.0
  %902 = vmatpush1.msra.mxu0 0.0
  %903 = vmatprep.subr.mxu0 0.0
  %904 = vmatpush1.msra.mxu0 0.0
  %905 = vmatprep.subr.mxu0 0.0
  %906 = vmatpush1.msra.mxu0 0.0
  %907 = vmatprep.subr.mxu0 0.0
  %908 = vmatpush1.msra.mxu0 0.0
  %909 = vmatprep.subr.mxu0 0.0
  %910 = vmatpush1.msra.mxu0 0.0
  %911 = vmatprep.subr.mxu0 0.0
  %912 = vmatpush1.msra.mxu0 0.0
  %913 = vmatprep.subr.mxu0 0.0
  %914 = vmatpush1.msra.mxu0 0.0
  %915 = vmatprep.subr.mxu0 0.0
  %916 = vmatpush1.msra.mxu0 0.0
  %917 = vmatprep.subr.mxu0 0.0
  %918 = vmatpush1.msra.mxu0 0.0
  %919 = vmatprep.subr.mxu0 0.0
  %920 = vmatpush1.msra.mxu0 0.0
  %921 = vmatprep.subr.mxu0 0.0
  %922 = vmatpush1.msra.mxu0 0.0
  %923 = vmatprep.subr.mxu0 0.0
  %924 = vmatpush1.msra.mxu0 0.0
  %925 = vmatprep.subr.mxu0 0.0
  %926 = vmatpush1.msra.mxu0 0.0
  %927 = vmatprep.subr.mxu0 0.0
  %928 = vmatpush1.msra.mxu0 0.0
  %929 = vmatprep.subr.mxu0 0.0
  %930 = vmatpush1.msra.mxu0 0.0
  %931 = vmatprep.subr.mxu0 0.0
  %932 = vmatpush1.msra.mxu0 0.0
  %933 = vmatprep.subr.mxu0 0.0
  %934 = vmatpush1.msra.mxu0 0.0
  %935 = vmatprep.subr.mxu0 0.0
  %936 = vmatpush1.msra.mxu0 0.0
  %937 = vmatprep.subr.mxu0 0.0
  %938 = vmatpush1.msra.mxu0 0.0
  %939 = vmatprep.subr.mxu0 0.0
  %940 = vmatpush1.msra.mxu0 0.0
  %941 = vmatprep.subr.mxu0 0.0
  %942 = vmatpush1.msra.mxu0 0.0
  %943 = vmatprep.subr.mxu0 0.0
  %944 = vmatpush1.msra.mxu0 0.0
  %945 = vmatprep.subr.mxu0 0.0
  %946 = vmatpush1.msra.mxu0 0.0
  %947 = vmatprep.subr.mxu0 0.0
  %948 = vmatpush1.msra.mxu0 0.0
  %949 = vmatprep.mubr.f32.mxu0 0.0
  %950 = vmatmul.mubr.f32.gmra.mrb[0].mxu0 %v812
  %v951 = vpop.f32.mrb[0].mxu0
  %v952 = vadd.f32 0.0, %v951
  %v953 = vpop.f32.mrb[0].mxu0
  %954 = vdwg.mxu0
  %v955 = vadd.f32 %v808, %v881
  %v956 = vmul.f32 %v955, 0.5
  %v957 = vtanh.pop %v956
  %v958 = vadd.f32 %v957, 1.0
  %v959 = vmul.f32 %v958, 0.5
  %v960 = vadd.f32 %v809, %v883
  %v961 = vmul.f32 %v960, 0.5
  %v962 = vtanh.pop %v961
  %v963 = vadd.f32 %v962, 1.0
  %v964 = vmul.f32 %v963, 0.5
  %v965 = vadd.f32 %v952, %v45
  %v966 = vmul.f32 %v959, %v965
  %v967 = vadd.f32 %v810, %v966
  %v968 = vtanh.pop %v967
  %v969 = vsub.f32 1.0, %v964
  %v970 = vmul.f32 %v969, %v968
  %v971 = vmul.f32 %v964, %v806
  %v972 = vadd.f32 %v970, %v971
  %973 = vst.msk [vmem:[#allocation3 + $0x10] sm:$0xff] %vm56, %v972
  %v974 = vld [vmem:[#allocation2 + $0x48] sm:$0xff]
  %v975 = vld [vmem:[#allocation2 + $0x50] sm:$0xff]
  %v976 = vld [vmem:[#allocation2 + $0x58] sm:$0xff]
  %v978 = vsel %vm56, %v972, 0
  %980 = vmatprep.subr.mxu0 %v32
  %981 = vmatpush1.msra.mxu0 %v31
  %982 = vmatprep.subr.mxu0 %v35
  %983 = vmatpush1.msra.mxu0 %v34
  %984 = vmatprep.subr.mxu0 %v38
  %985 = vmatpush1.msra.mxu0 %v37
  %986 = vmatprep.subr.mxu0 %v41
  %987 = vmatpush1.msra.mxu0 %v40
  %988 = vmatprep.subr.mxu0 0.0
  %989 = vmatpush1.msra.mxu0 0.0
  %990 = vmatprep.subr.mxu0 0.0
  %991 = vmatpush1.msra.mxu0 0.0
  %992 = vmatprep.subr.mxu0 0.0
  %993 = vmatpush1.msra.mxu0 0.0
  %994 = vmatprep.subr.mxu0 0.0
  %995 = vmatpush1.msra.mxu0 0.0
  %996 = vmatprep.subr.mxu0 0.0
  %997 = vmatpush1.msra.mxu0 0.0
  %998 = vmatprep.subr.mxu0 0.0
  %999 = vmatpush1.msra.mxu0 0.0
  %1000 = vmatprep.subr.mxu0 0.0
  %1001 = vmatpush1.msra.mxu0 0.0
  %1002 = vmatprep.subr.mxu0 0.0
  %1003 = vmatpush1.msra.mxu0 0.0
  %1004 = vmatprep.subr.mxu0 0.0
  %1005 = vmatpush1.msra.mxu0 0.0
  %1006 = vmatprep.subr.mxu0 0.0
  %1007 = vmatpush1.msra.mxu0 0.0
  %1008 = vmatprep.subr.mxu0 0.0
  %1009 = vmatpush1.msra.mxu0 0.0
  %1010 = vmatprep.subr.mxu0 0.0
  %1011 = vmatpush1.msra.mxu0 0.0
  %1012 = vmatprep.subr.mxu0 0.0
  %1013 = vmatpush1.msra.mxu0 0.0
  %1014 = vmatprep.subr.mxu0 0.0
  %1015 = vmatpush1.msra.mxu0 0.0
  %1016 = vmatprep.subr.mxu0 0.0
  %1017 = vmatpush1.msra.mxu0 0.0
  %1018 = vmatprep.subr.mxu0 0.0
  %1019 = vmatpush1.msra.mxu0 0.0
  %1020 = vmatprep.subr.mxu0 0.0
  %1021 = vmatpush1.msra.mxu0 0.0
  %1022 = vmatprep.subr.mxu0 0.0
  %1023 = vmatpush1.msra.mxu0 0.0
  %1024 = vmatprep.subr.mxu0 0.0
  %1025 = vmatpush1.msra.mxu0 0.0
  %1026 = vmatprep.subr.mxu0 0.0
  %1027 = vmatpush1.msra.mxu0 0.0
  %1028 = vmatprep.subr.mxu0 0.0
  %1029 = vmatpush1.msra.mxu0 0.0
  %1030 = vmatprep.subr.mxu0 0.0
  %1031 = vmatpush1.msra.mxu0 0.0
  %1032 = vmatprep.subr.mxu0 0.0
  %1033 = vmatpush1.msra.mxu0 0.0
  %1034 = vmatprep.subr.mxu0 0.0
  %1035 = vmatpush1.msra.mxu0 0.0
  %1036 = vmatprep.subr.mxu0 0.0
  %1037 = vmatpush1.msra.mxu0 0.0
  %1038 = vmatprep.subr.mxu0 0.0
  %1039 = vmatpush1.msra.mxu0 0.0
  %1040 = vmatprep.subr.mxu0 0.0
  %1041 = vmatpush1.msra.mxu0 0.0
  %1042 = vmatprep.subr.mxu0 0.0
  %1043 = vmatpush1.msra.mxu0 0.0
  %1044 = vmatprep.mubr.f32.mxu0 0.0
  %1045 = vmatmul.mubr.f32.gmra.mrb[0].mxu0 %v978
  %v1046 = vpop.f32.mrb[0].mxu0
  %v1047 = vadd.f32 0.0, %v1046
  %v1048 = vpop.f32.mrb[0].mxu0
  %v1049 = vadd.f32 0.0, %v1048
  %1050 = vdwg.mxu0
  %1051 = vmatprep.subr.mxu0 0.0
  %1052 = vmatpush1.msra.mxu0 %v33
  %1053 = vmatprep.subr.mxu0 0.0
  %1054 = vmatpush1.msra.mxu0 %v36
  %1055 = vmatprep.subr.mxu0 0.0
  %1056 = vmatpush1.msra.mxu0 %v39
  %1057 = vmatprep.subr.mxu0 0.0
  %1058 = vmatpush1.msra.mxu0 %v42
  %1059 = vmatprep.subr.mxu0 0.0
  %1060 = vmatpush1.msra.mxu0 0.0
  %1061 = vmatprep.subr.mxu0 0.0
  %1062 = vmatpush1.msra.mxu0 0.0
  %1063 = vmatprep.subr.mxu0 0.0
  %1064 = vmatpush1.msra.mxu0 0.0
  %1065 = vmatprep.subr.mxu0 0.0
  %1066 = vmatpush1.msra.mxu0 0.0
  %1067 = vmatprep.subr.mxu0 0.0
  %1068 = vmatpush1.msra.mxu0 0.0
  %1069 = vmatprep.subr.mxu0 0.0
  %1070 = vmatpush1.msra.mxu0 0.0
  %1071 = vmatprep.subr.mxu0 0.0
  %1072 = vmatpush1.msra.mxu0 0.0
  %1073 = vmatprep.subr.mxu0 0.0
  %1074 = vmatpush1.msra.mxu0 0.0
  %1075 = vmatprep.subr.mxu0 0.0
  %1076 = vmatpush1.msra.mxu0 0.0
  %1077 = vmatprep.subr.mxu0 0.0
  %1078 = vmatpush1.msra.mxu0 0.0
  %1079 = vmatprep.subr.mxu0 0.0
  %1080 = vmatpush1.msra.mxu0 0.0
  %1081 = vmatprep.subr.mxu0 0.0
  %1082 = vmatpush1.msra.mxu0 0.0
  %1083 = vmatprep.subr.mxu0 0.0
  %1084 = vmatpush1.msra.mxu0 0.0
  %1085 = vmatprep.subr.mxu0 0.0
  %1086 = vmatpush1.msra.mxu0 0.0
  %1087 = vmatprep.subr.mxu0 0.0
  %1088 = vmatpush1.msra.mxu0 0.0
  %1089 = vmatprep.subr.mxu0 0.0
  %1090 = vmatpush1.msra.mxu0 0.0
  %1091 = vmatprep.subr.mxu0 0.0
  %1092 = vmatpush1.msra.mxu0 0.0
  %1093 = vmatprep.subr.mxu0 0.0
  %1094 = vmatpush1.msra.mxu0 0.0
  %1095 = vmatprep.subr.mxu0 0.0
  %1096 = vmatpush1.msra.mxu0 0.0
  %1097 = vmatprep.subr.mxu0 0.0
  %1098 = vmatpush1.msra.mxu0 0.0
  %1099 = vmatprep.subr.mxu0 0.0
  %1100 = vmatpush1.msra.mxu0 0.0
  %1101 = vmatprep.subr.mxu0 0.0
  %1102 = vmatpush1.msra.mxu0 0.0
  %1103 = vmatprep.subr.mxu0 0.0
  %1104 = vmatpush1.msra.mxu0 0.0
  %1105 = vmatprep.subr.mxu0 0.0
  %1106 = vmatpush1.msra.mxu0 0.0
  %1107 = vmatprep.subr.mxu0 0.0
  %1108 = vmatpush1.msra.mxu0 0.0
  %1109 = vmatprep.subr.mxu0 0.0
  %1110 = vmatpush1.msra.mxu0 0.0
  %1111 = vmatprep.subr.mxu0 0.0
  %1112 = vmatpush1.msra.mxu0 0.0
  %1113 = vmatprep.subr.mxu0 0.0
  %1114 = vmatpush1.msra.mxu0 0.0
  %1115 = vmatprep.mubr.f32.mxu0 0.0
  %1116 = vmatmul.mubr.f32.gmra.mrb[0].mxu0 %v978
  %v1117 = vpop.f32.mrb[0].mxu0
  %v1118 = vadd.f32 0.0, %v1117
  %v1119 = vpop.f32.mrb[0].mxu0
  %1120 = vdwg.mxu0
  %v1121 = vadd.f32 %v974, %v1047
  %v1122 = vmul.f32 %v1121, 0.5
  %v1123 = vtanh.pop %v1122
  %v1124 = vadd.f32 %v1123, 1.0
  %v1125 = vmul.f32 %v1124, 0.5
  %v1126 = vadd.f32 %v975, %v1049
  %v1127 = vmul.f32 %v1126, 0.5
  %v1128 = vtanh.pop %v1127
  %v1129 = vadd.f32 %v1128, 1.0
  %v1130 = vmul.f32 %v1129, 0.5
  %v1131 = vadd.f32 %v1118, %v45
  %v1132 = vmul.f32 %v1125, %v1131
  %v1133 = vadd.f32 %v976, %v1132
  %v1134 = vtanh.pop %v1133
  %v1135 = vsub.f32 1.0, %v1130
  %v1136 = vmul.f32 %v1135, %v1134
  %v1137 = vmul.f32 %v1130, %v972
  %v1138 = vadd.f32 %v1136, %v1137
  %1139 = vst.msk [vmem:[#allocation3 + $0x18] sm:$0xff] %vm56, %v1138
  %v1140 = vld [vmem:[#allocation2 + $0x60] sm:$0xff]
  %v1141 = vld [vmem:[#allocation2 + $0x68] sm:$0xff]
  %v1142 = vld [vmem:[#allocation2 + $0x70] sm:$0xff]
  %v1144 = vsel %vm56, %v1138, 0
  %1146 = vmatprep.subr.mxu0 %v32
  %1147 = vmatpush1.msra.mxu0 %v31
  %1148 = vmatprep.subr.mxu0 %v35
  %1149 = vmatpush1.msra.mxu0 %v34
  %1150 = vmatprep.subr.mxu0 %v38
  %1151 = vmatpush1.msra.mxu0 %v37
  %1152 = vmatprep.subr.mxu0 %v41
  %1153 = vmatpush1.msra.mxu0 %v40
  %1154 = vmatprep.subr.mxu0 0.0
  %1155 = vmatpush1.msra.mxu0 0.0
  %1156 = vmatprep.subr.mxu0 0.0
  %1157 = vmatpush1.msra.mxu0 0.0
  %1158 = vmatprep.subr.mxu0 0.0
  %1159 = vmatpush1.msra.mxu0 0.0
  %1160 = vmatprep.subr.mxu0 0.0
  %1161 = vmatpush1.msra.mxu0 0.0
  %1162 = vmatprep.subr.mxu0 0.0
  %1163 = vmatpush1.msra.mxu0 0.0
  %1164 = vmatprep.subr.mxu0 0.0
  %1165 = vmatpush1.msra.mxu0 0.0
  %1166 = vmatprep.subr.mxu0 0.0
  %1167 = vmatpush1.msra.mxu0 0.0
  %1168 = vmatprep.subr.mxu0 0.0
  %1169 = vmatpush1.msra.mxu0 0.0
  %1170 = vmatprep.subr.mxu0 0.0
  %1171 = vmatpush1.msra.mxu0 0.0
  %1172 = vmatprep.subr.mxu0 0.0
  %1173 = vmatpush1.msra.mxu0 0.0
  %1174 = vmatprep.subr.mxu0 0.0
  %1175 = vmatpush1.msra.mxu0 0.0
  %1176 = vmatprep.subr.mxu0 0.0
  %1177 = vmatpush1.msra.mxu0 0.0
  %1178 = vmatprep.subr.mxu0 0.0
  %1179 = vmatpush1.msra.mxu0 0.0
  %1180 = vmatprep.subr.mxu0 0.0
  %1181 = vmatpush1.msra.mxu0 0.0
  %1182 = vmatprep.subr.mxu0 0.0
  %1183 = vmatpush1.msra.mxu0 0.0
  %1184 = vmatprep.subr.mxu0 0.0
  %1185 = vmatpush1.msra.mxu0 0.0
  %1186 = vmatprep.subr.mxu0 0.0
  %1187 = vmatpush1.msra.mxu0 0.0
  %1188 = vmatprep.subr.mxu0 0.0
  %1189 = vmatpush1.msra.mxu0 0.0
  %1190 = vmatprep.subr.mxu0 0.0
  %1191 = vmatpush1.msra.mxu0 0.0
  %1192 = vmatprep.subr.mxu0 0.0
  %1193 = vmatpush1.msra.mxu0 0.0
  %1194 = vmatprep.subr.mxu0 0.0
  %1195 = vmatpush1.msra.mxu0 0.0
  %1196 = vmatprep.subr.mxu0 0.0
  %1197 = vmatpush1.msra.mxu0 0.0
  %1198 = vmatprep.subr.mxu0 0.0
  %1199 = vmatpush1.msra.mxu0 0.0
  %1200 = vmatprep.subr.mxu0 0.0
  %1201 = vmatpush1.msra.mxu0 0.0
  %1202 = vmatprep.subr.mxu0 0.0
  %1203 = vmatpush1.msra.mxu0 0.0
  %1204 = vmatprep.subr.mxu0 0.0
  %1205 = vmatpush1.msra.mxu0 0.0
  %1206 = vmatprep.subr.mxu0 0.0
  %1207 = vmatpush1.msra.mxu0 0.0
  %1208 = vmatprep.subr.mxu0 0.0
  %1209 = vmatpush1.msra.mxu0 0.0
  %1210 = vmatprep.mubr.f32.mxu0 0.0
  %1211 = vmatmul.mubr.f32.gmra.mrb[0].mxu0 %v1144
  %v1212 = vpop.f32.mrb[0].mxu0
  %v1213 = vadd.f32 0.0, %v1212
  %v1214 = vpop.f32.mrb[0].mxu0
  %v1215 = vadd.f32 0.0, %v1214
  %1216 = vdwg.mxu0
  %1217 = vmatprep.subr.mxu0 0.0
  %1218 = vmatpush1.msra.mxu0 %v33
  %1219 = vmatprep.subr.mxu0 0.0
  %1220 = vmatpush1.msra.mxu0 %v36
  %1221 = vmatprep.subr.mxu0 0.0
  %1222 = vmatpush1.msra.mxu0 %v39
  %1223 = vmatprep.subr.mxu0 0.0
  %1224 = vmatpush1.msra.mxu0 %v42
  %1225 = vmatprep.subr.mxu0 0.0
  %1226 = vmatpush1.msra.mxu0 0.0
  %1227 = vmatprep.subr.mxu0 0.0
  %1228 = vmatpush1.msra.mxu0 0.0
  %1229 = vmatprep.subr.mxu0 0.0
  %1230 = vmatpush1.msra.mxu0 0.0
  %1231 = vmatprep.subr.mxu0 0.0
  %1232 = vmatpush1.msra.mxu0 0.0
  %1233 = vmatprep.subr.mxu0 0.0
  %1234 = vmatpush1.msra.mxu0 0.0
  %1235 = vmatprep.subr.mxu0 0.0
  %1236 = vmatpush1.msra.mxu0 0.0
  %1237 = vmatprep.subr.mxu0 0.0
  %1238 = vmatpush1.msra.mxu0 0.0
  %1239 = vmatprep.subr.mxu0 0.0
  %1240 = vmatpush1.msra.mxu0 0.0
  %1241 = vmatprep.subr.mxu0 0.0
  %1242 = vmatpush1.msra.mxu0 0.0
  %1243 = vmatprep.subr.mxu0 0.0
  %1244 = vmatpush1.msra.mxu0 0.0
  %1245 = vmatprep.subr.mxu0 0.0
  %1246 = vmatpush1.msra.mxu0 0.0
  %1247 = vmatprep.subr.mxu0 0.0
  %1248 = vmatpush1.msra.mxu0 0.0
  %1249 = vmatprep.subr.mxu0 0.0
  %1250 = vmatpush1.msra.mxu0 0.0
  %1251 = vmatprep.subr.mxu0 0.0
  %1252 = vmatpush1.msra.mxu0 0.0
  %1253 = vmatprep.subr.mxu0 0.0
  %1254 = vmatpush1.msra.mxu0 0.0
  %1255 = vmatprep.subr.mxu0 0.0
  %1256 = vmatpush1.msra.mxu0 0.0
  %1257 = vmatprep.subr.mxu0 0.0
  %1258 = vmatpush1.msra.mxu0 0.0
  %1259 = vmatprep.subr.mxu0 0.0
  %1260 = vmatpush1.msra.mxu0 0.0
  %1261 = vmatprep.subr.mxu0 0.0
  %1262 = vmatpush1.msra.mxu0 0.0
  %1263 = vmatprep.subr.mxu0 0.0
  %1264 = vmatpush1.msra.mxu0 0.0
  %1265 = vmatprep.subr.mxu0 0.0
  %1266 = vmatpush1.msra.mxu0 0.0
  %1267 = vmatprep.subr.mxu0 0.0
  %1268 = vmatpush1.msra.mxu0 0.0
  %1269 = vmatprep.subr.mxu0 0.0
  %1270 = vmatpush1.msra.mxu0 0.0
  %1271 = vmatprep.subr.mxu0 0.0
  %1272 = vmatpush1.msra.mxu0 0.0
  %1273 = vmatprep.subr.mxu0 0.0
  %1274 = vmatpush1.msra.mxu0 0.0
  %1275 = vmatprep.subr.mxu0 0.0
  %1276 = vmatpush1.msra.mxu0 0.0
  %1277 = vmatprep.subr.mxu0 0.0
  %1278 = vmatpush1.msra.mxu0 0.0
  %1279 = vmatprep.subr.mxu0 0.0
  %1280 = vmatpush1.msra.mxu0 0.0
  %1281 = vmatprep.mubr.f32.mxu0 0.0
  %1282 = vmatmul.mubr.f32.gmra.mrb[0].mxu0 %v1144
  %v1283 = vpop.f32.mrb[0].mxu0
  %v1284 = vadd.f32 0.0, %v1283
  %v1285 = vpop.f32.mrb[0].mxu0
  %1286 = vdwg.mxu0
  %v1287 = vadd.f32 %v1140, %v1213
  %v1288 = vmul.f32 %v1287, 0.5
  %v1289 = vtanh.pop %v1288
  %v1290 = vadd.f32 %v1289, 1.0
  %v1291 = vmul.f32 %v1290, 0.5
  %v1292 = vadd.f32 %v1141, %v1215
  %v1293 = vmul.f32 %v1292, 0.5
  %v1294 = vtanh.pop %v1293
  %v1295 = vadd.f32 %v1294, 1.0
  %v1296 = vmul.f32 %v1295, 0.5
  %v1297 = vadd.f32 %v1284, %v45
  %v1298 = vmul.f32 %v1291, %v1297
  %v1299 = vadd.f32 %v1142, %v1298
  %v1300 = vtanh.pop %v1299
  %v1301 = vsub.f32 1.0, %v1296
  %v1302 = vmul.f32 %v1301, %v1300
  %v1303 = vmul.f32 %v1296, %v1138
  %v1304 = vadd.f32 %v1302, %v1303
  %1305 = vst.msk [vmem:[#allocation3 + $0x20] sm:$0xff] %vm56, %v1304
  %v1306 = vld [vmem:[#allocation2 + $0x78] sm:$0xff]
  %v1307 = vld [vmem:[#allocation2 + $0x80] sm:$0xff]
  %v1308 = vld [vmem:[#allocation2 + $0x88] sm:$0xff]
  %v1310 = vsel %vm56, %v1304, 0
  %1312 = vmatprep.subr.mxu0 %v32
  %1313 = vmatpush1.msra.mxu0 %v31
  %1314 = vmatprep.subr.mxu0 %v35
  %1315 = vmatpush1.msra.mxu0 %v34
  %1316 = vmatprep.subr.mxu0 %v38
  %1317 = vmatpush1.msra.mxu0 %v37
  %1318 = vmatprep.subr.mxu0 %v41
  %1319 = vmatpush1.msra.mxu0 %v40
  %1320 = vmatprep.subr.mxu0 0.0
  %1321 = vmatpush1.msra.mxu0 0.0
  %1322 = vmatprep.subr.mxu0 0.0
  %1323 = vmatpush1.msra.mxu0 0.0
  %1324 = vmatprep.subr.mxu0 0.0
  %1325 = vmatpush1.msra.mxu0 0.0
  %1326 = vmatprep.subr.mxu0 0.0
  %1327 = vmatpush1.msra.mxu0 0.0
  %1328 = vmatprep.subr.mxu0 0.0
  %1329 = vmatpush1.msra.mxu0 0.0
  %1330 = vmatprep.subr.mxu0 0.0
  %1331 = vmatpush1.msra.mxu0 0.0
  %1332 = vmatprep.subr.mxu0 0.0
  %1333 = vmatpush1.msra.mxu0 0.0
  %1334 = vmatprep.subr.mxu0 0.0
  %1335 = vmatpush1.msra.mxu0 0.0
  %1336 = vmatprep.subr.mxu0 0.0
  %1337 = vmatpush1.msra.mxu0 0.0
  %1338 = vmatprep.subr.mxu0 0.0
  %1339 = vmatpush1.msra.mxu0 0.0
  %1340 = vmatprep.subr.mxu0 0.0
  %1341 = vmatpush1.msra.mxu0 0.0
  %1342 = vmatprep.subr.mxu0 0.0
  %1343 = vmatpush1.msra.mxu0 0.0
  %1344 = vmatprep.subr.mxu0 0.0
  %1345 = vmatpush1.msra.mxu0 0.0
  %1346 = vmatprep.subr.mxu0 0.0
  %1347 = vmatpush1.msra.mxu0 0.0
  %1348 = vmatprep.subr.mxu0 0.0
  %1349 = vmatpush1.msra.mxu0 0.0
  %1350 = vmatprep.subr.mxu0 0.0
  %1351 = vmatpush1.msra.mxu0 0.0
  %1352 = vmatprep.subr.mxu0 0.0
  %1353 = vmatpush1.msra.mxu0 0.0
  %1354 = vmatprep.subr.mxu0 0.0
  %1355 = vmatpush1.msra.mxu0 0.0
  %1356 = vmatprep.subr.mxu0 0.0
  %1357 = vmatpush1.msra.mxu0 0.0
  %1358 = vmatprep.subr.mxu0 0.0
  %1359 = vmatpush1.msra.mxu0 0.0
  %1360 = vmatprep.subr.mxu0 0.0
  %1361 = vmatpush1.msra.mxu0 0.0
  %1362 = vmatprep.subr.mxu0 0.0
  %1363 = vmatpush1.msra.mxu0 0.0
  %1364 = vmatprep.subr.mxu0 0.0
  %1365 = vmatpush1.msra.mxu0 0.0
  %1366 = vmatprep.subr.mxu0 0.0
  %1367 = vmatpush1.msra.mxu0 0.0
  %1368 = vmatprep.subr.mxu0 0.0
  %1369 = vmatpush1.msra.mxu0 0.0
  %1370 = vmatprep.subr.mxu0 0.0
  %1371 = vmatpush1.msra.mxu0 0.0
  %1372 = vmatprep.subr.mxu0 0.0
  %1373 = vmatpush1.msra.mxu0 0.0
  %1374 = vmatprep.subr.mxu0 0.0
  %1375 = vmatpush1.msra.mxu0 0.0
  %1376 = vmatprep.mubr.f32.mxu0 0.0
  %1377 = vmatmul.mubr.f32.gmra.mrb[0].mxu0 %v1310
  %v1378 = vpop.f32.mrb[0].mxu0
  %v1379 = vadd.f32 0.0, %v1378
  %v1380 = vpop.f32.mrb[0].mxu0
  %v1381 = vadd.f32 0.0, %v1380
  %1382 = vdwg.mxu0
  %1383 = vmatprep.subr.mxu0 0.0
  %1384 = vmatpush1.msra.mxu0 %v33
  %1385 = vmatprep.subr.mxu0 0.0
  %1386 = vmatpush1.msra.mxu0 %v36
  %1387 = vmatprep.subr.mxu0 0.0
  %1388 = vmatpush1.msra.mxu0 %v39
  %1389 = vmatprep.subr.mxu0 0.0
  %1390 = vmatpush1.msra.mxu0 %v42
  %1391 = vmatprep.subr.mxu0 0.0
  %1392 = vmatpush1.msra.mxu0 0.0
  %1393 = vmatprep.subr.mxu0 0.0
  %1394 = vmatpush1.msra.mxu0 0.0
  %1395 = vmatprep.subr.mxu0 0.0
  %1396 = vmatpush1.msra.mxu0 0.0
  %1397 = vmatprep.subr.mxu0 0.0
  %1398 = vmatpush1.msra.mxu0 0.0
  %1399 = vmatprep.subr.mxu0 0.0
  %1400 = vmatpush1.msra.mxu0 0.0
  %1401 = vmatprep.subr.mxu0 0.0
  %1402 = vmatpush1.msra.mxu0 0.0
  %1403 = vmatprep.subr.mxu0 0.0
  %1404 = vmatpush1.msra.mxu0 0.0
  %1405 = vmatprep.subr.mxu0 0.0
  %1406 = vmatpush1.msra.mxu0 0.0
  %1407 = vmatprep.subr.mxu0 0.0
  %1408 = vmatpush1.msra.mxu0 0.0
  %1409 = vmatprep.subr.mxu0 0.0
  %1410 = vmatpush1.msra.mxu0 0.0
  %1411 = vmatprep.subr.mxu0 0.0
  %1412 = vmatpush1.msra.mxu0 0.0
  %1413 = vmatprep.subr.mxu0 0.0
  %1414 = vmatpush1.msra.mxu0 0.0
  %1415 = vmatprep.subr.mxu0 0.0
  %1416 = vmatpush1.msra.mxu0 0.0
  %1417 = vmatprep.subr.mxu0 0.0
  %1418 = vmatpush1.msra.mxu0 0.0
  %1419 = vmatprep.subr.mxu0 0.0
  %1420 = vmatpush1.msra.mxu0 0.0
  %1421 = vmatprep.subr.mxu0 0.0
  %1422 = vmatpush1.msra.mxu0 0.0
  %1423 = vmatprep.subr.mxu0 0.0
  %1424 = vmatpush1.msra.mxu0 0.0
  %1425 = vmatprep.subr.mxu0 0.0
  %1426 = vmatpush1.msra.mxu0 0.0
  %1427 = vmatprep.subr.mxu0 0.0
  %1428 = vmatpush1.msra.mxu0 0.0
  %1429 = vmatprep.subr.mxu0 0.0
  %1430 = vmatpush1.msra.mxu0 0.0
  %1431 = vmatprep.subr.mxu0 0.0
  %1432 = vmatpush1.msra.mxu0 0.0
  %1433 = vmatprep.subr.mxu0 0.0
  %1434 = vmatpush1.msra.mxu0 0.0
  %1435 = vmatprep.subr.mxu0 0.0
  %1436 = vmatpush1.msra.mxu0 0.0
  %1437 = vmatprep.subr.mxu0 0.0
  %1438 = vmatpush1.msra.mxu0 0.0
  %1439 = vmatprep.subr.mxu0 0.0
  %1440 = vmatpush1.msra.mxu0 0.0
  %1441 = vmatprep.subr.mxu0 0.0
  %1442 = vmatpush1.msra.mxu0 0.0
  %1443 = vmatprep.subr.mxu0 0.0
  %1444 = vmatpush1.msra.mxu0 0.0
  %1445 = vmatprep.subr.mxu0 0.0
  %1446 = vmatpush1.msra.mxu0 0.0
  %1447 = vmatprep.mubr.f32.mxu0 0.0
  %1448 = vmatmul.mubr.f32.gmra.mrb[0].mxu0 %v1310
  %v1449 = vpop.f32.mrb[0].mxu0
  %v1450 = vadd.f32 0.0, %v1449
  %v1451 = vpop.f32.mrb[0].mxu0
  %1452 = vdwg.mxu0
  %v1453 = vadd.f32 %v1306, %v1379
  %v1454 = vmul.f32 %v1453, 0.5
  %v1455 = vtanh.pop %v1454
  %v1456 = vadd.f32 %v1455, 1.0
  %v1457 = vmul.f32 %v1456, 0.5
  %v1458 = vadd.f32 %v1307, %v1381
  %v1459 = vmul.f32 %v1458, 0.5
  %v1460 = vtanh.pop %v1459
  %v1461 = vadd.f32 %v1460, 1.0
  %v1462 = vmul.f32 %v1461, 0.5
  %v1463 = vadd.f32 %v1450, %v45
  %v1464 = vmul.f32 %v1457, %v1463
  %v1465 = vadd.f32 %v1308, %v1464
  %v1466 = vtanh.pop %v1465
  %v1467 = vsub.f32 1.0, %v1462
  %v1468 = vmul.f32 %v1467, %v1466
  %v1469 = vmul.f32 %v1462, %v1304
  %v1470 = vadd.f32 %v1468, %v1469
  %1471 = vst.msk [vmem:[#allocation3 + $0x28] sm:$0xff] %vm56, %v1470
  %v1472 = vld [vmem:[#allocation2 + $0x90] sm:$0xff]
  %v1473 = vld [vmem:[#allocation2 + $0x98] sm:$0xff]
  %v1474 = vld [vmem:[#allocation2 + $0xa0] sm:$0xff]
  %v1476 = vsel %vm56, %v1470, 0
  %1478 = vmatprep.subr.mxu0 %v32
  %1479 = vmatpush1.msra.mxu0 %v31
  %1480 = vmatprep.subr.mxu0 %v35
  %1481 = vmatpush1.msra.mxu0 %v34
  %1482 = vmatprep.subr.mxu0 %v38
  %1483 = vmatpush1.msra.mxu0 %v37
  %1484 = vmatprep.subr.mxu0 %v41
  %1485 = vmatpush1.msra.mxu0 %v40
  %1486 = vmatprep.subr.mxu0 0.0
  %1487 = vmatpush1.msra.mxu0 0.0
  %1488 = vmatprep.subr.mxu0 0.0
  %1489 = vmatpush1.msra.mxu0 0.0
  %1490 = vmatprep.subr.mxu0 0.0
  %1491 = vmatpush1.msra.mxu0 0.0
  %1492 = vmatprep.subr.mxu0 0.0
  %1493 = vmatpush1.msra.mxu0 0.0
  %1494 = vmatprep.subr.mxu0 0.0
  %1495 = vmatpush1.msra.mxu0 0.0
  %1496 = vmatprep.subr.mxu0 0.0
  %1497 = vmatpush1.msra.mxu0 0.0
  %1498 = vmatprep.subr.mxu0 0.0
  %1499 = vmatpush1.msra.mxu0 0.0
  %1500 = vmatprep.subr.mxu0 0.0
  %1501 = vmatpush1.msra.mxu0 0.0
  %1502 = vmatprep.subr.mxu0 0.0
  %1503 = vmatpush1.msra.mxu0 0.0
  %1504 = vmatprep.subr.mxu0 0.0
  %1505 = vmatpush1.msra.mxu0 0.0
  %1506 = vmatprep.subr.mxu0 0.0
  %1507 = vmatpush1.msra.mxu0 0.0
  %1508 = vmatprep.subr.mxu0 0.0
  %1509 = vmatpush1.msra.mxu0 0.0
  %1510 = vmatprep.subr.mxu0 0.0
  %1511 = vmatpush1.msra.mxu0 0.0
  %1512 = vmatprep.subr.mxu0 0.0
  %1513 = vmatpush1.msra.mxu0 0.0
  %1514 = vmatprep.subr.mxu0 0.0
  %1515 = vmatpush1.msra.mxu0 0.0
  %1516 = vmatprep.subr.mxu0 0.0
  %1517 = vmatpush1.msra.mxu0 0.0
  %1518 = vmatprep.subr.mxu0 0.0
  %1519 = vmatpush1.msra.mxu0 0.0
  %1520 = vmatprep.subr.mxu0 0.0
  %1521 = vmatpush1.msra.mxu0 0.0
  %1522 = vmatprep.subr.mxu0 0.0
  %1523 = vmatpush1.msra.mxu0 0.0
  %1524 = vmatprep.subr.mxu0 0.0
  %1525 = vmatpush1.msra.mxu0 0.0
  %1526 = vmatprep.subr.mxu0 0.0
  %1527 = vmatpush1.msra.mxu0 0.0
  %1528 = vmatprep.subr.mxu0 0.0
  %1529 = vmatpush1.msra.mxu0 0.0
  %1530 = vmatprep.subr.mxu0 0.0
  %1531 = vmatpush1.msra.mxu0 0.0
  %1532 = vmatprep.subr.mxu0 0.0
  %1533 = vmatpush1.msra.mxu0 0.0
  %1534 = vmatprep.subr.mxu0 0.0
  %1535 = vmatpush1.msra.mxu0 0.0
  %1536 = vmatprep.subr.mxu0 0.0
  %1537 = vmatpush1.msra.mxu0 0.0
  %1538 = vmatprep.subr.mxu0 0.0
  %1539 = vmatpush1.msra.mxu0 0.0
  %1540 = vmatprep.subr.mxu0 0.0
  %1541 = vmatpush1.msra.mxu0 0.0
  %1542 = vmatprep.mubr.f32.mxu0 0.0
  %1543 = vmatmul.mubr.f32.gmra.mrb[0].mxu0 %v1476
  %v1544 = vpop.f32.mrb[0].mxu0
  %v1545 = vadd.f32 0.0, %v1544
  %v1546 = vpop.f32.mrb[0].mxu0
  %v1547 = vadd.f32 0.0, %v1546
  %1548 = vdwg.mxu0
  %1549 = vmatprep.subr.mxu0 0.0
  %1550 = vmatpush1.msra.mxu0 %v33
  %1551 = vmatprep.subr.mxu0 0.0
  %1552 = vmatpush1.msra.mxu0 %v36
  %1553 = vmatprep.subr.mxu0 0.0
  %1554 = vmatpush1.msra.mxu0 %v39
  %1555 = vmatprep.subr.mxu0 0.0
  %1556 = vmatpush1.msra.mxu0 %v42
  %1557 = vmatprep.subr.mxu0 0.0
  %1558 = vmatpush1.msra.mxu0 0.0
  %1559 = vmatprep.subr.mxu0 0.0
  %1560 = vmatpush1.msra.mxu0 0.0
  %1561 = vmatprep.subr.mxu0 0.0
  %1562 = vmatpush1.msra.mxu0 0.0
  %1563 = vmatprep.subr.mxu0 0.0
  %1564 = vmatpush1.msra.mxu0 0.0
  %1565 = vmatprep.subr.mxu0 0.0
  %1566 = vmatpush1.msra.mxu0 0.0
  %1567 = vmatprep.subr.mxu0 0.0
  %1568 = vmatpush1.msra.mxu0 0.0
  %1569 = vmatprep.subr.mxu0 0.0
  %1570 = vmatpush1.msra.mxu0 0.0
  %1571 = vmatprep.subr.mxu0 0.0
  %1572 = vmatpush1.msra.mxu0 0.0
  %1573 = vmatprep.subr.mxu0 0.0
  %1574 = vmatpush1.msra.mxu0 0.0
  %1575 = vmatprep.subr.mxu0 0.0
  %1576 = vmatpush1.msra.mxu0 0.0
  %1577 = vmatprep.subr.mxu0 0.0
  %1578 = vmatpush1.msra.mxu0 0.0
  %1579 = vmatprep.subr.mxu0 0.0
  %1580 = vmatpush1.msra.mxu0 0.0
  %1581 = vmatprep.subr.mxu0 0.0
  %1582 = vmatpush1.msra.mxu0 0.0
  %1583 = vmatprep.subr.mxu0 0.0
  %1584 = vmatpush1.msra.mxu0 0.0
  %1585 = vmatprep.subr.mxu0 0.0
  %1586 = vmatpush1.msra.mxu0 0.0
  %1587 = vmatprep.subr.mxu0 0.0
  %1588 = vmatpush1.msra.mxu0 0.0
  %1589 = vmatprep.subr.mxu0 0.0
  %1590 = vmatpush1.msra.mxu0 0.0
  %1591 = vmatprep.subr.mxu0 0.0
  %1592 = vmatpush1.msra.mxu0 0.0
  %1593 = vmatprep.subr.mxu0 0.0
  %1594 = vmatpush1.msra.mxu0 0.0
  %1595 = vmatprep.subr.mxu0 0.0
  %1596 = vmatpush1.msra.mxu0 0.0
  %1597 = vmatprep.subr.mxu0 0.0
  %1598 = vmatpush1.msra.mxu0 0.0
  %1599 = vmatprep.subr.mxu0 0.0
  %1600 = vmatpush1.msra.mxu0 0.0
  %1601 = vmatprep.subr.mxu0 0.0
  %1602 = vmatpush1.msra.mxu0 0.0
  %1603 = vmatprep.subr.mxu0 0.0
  %1604 = vmatpush1.msra.mxu0 0.0
  %1605 = vmatprep.subr.mxu0 0.0
  %1606 = vmatpush1.msra.mxu0 0.0
  %1607 = vmatprep.subr.mxu0 0.0
  %1608 = vmatpush1.msra.mxu0 0.0
  %1609 = vmatprep.subr.mxu0 0.0
  %1610 = vmatpush1.msra.mxu0 0.0
  %1611 = vmatprep.subr.mxu0 0.0
  %1612 = vmatpush1.msra.mxu0 0.0
  %1613 = vmatprep.mubr.f32.mxu0 0.0
  %1614 = vmatmul.mubr.f32.gmra.mrb[0].mxu0 %v1476
  %v1615 = vpop.f32.mrb[0].mxu0
  %v1616 = vadd.f32 0.0, %v1615
  %v1617 = vpop.f32.mrb[0].mxu0
  %1618 = vdwg.mxu0
  %v1619 = vadd.f32 %v1472, %v1545
  %v1620 = vmul.f32 %v1619, 0.5
  %v1621 = vtanh.pop %v1620
  %v1622 = vadd.f32 %v1621, 1.0
  %v1623 = vmul.f32 %v1622, 0.5
  %v1624 = vadd.f32 %v1473, %v1547
  %v1625 = vmul.f32 %v1624, 0.5
  %v1626 = vtanh.pop %v1625
  %v1627 = vadd.f32 %v1626, 1.0
  %v1628 = vmul.f32 %v1627, 0.5
  %v1629 = vadd.f32 %v1616, %v45
  %v1630 = vmul.f32 %v1623, %v1629
  %v1631 = vadd.f32 %v1474, %v1630
  %v1632 = vtanh.pop %v1631
  %v1633 = vsub.f32 1.0, %v1628
  %v1634 = vmul.f32 %v1633, %v1632
  %v1635 = vmul.f32 %v1628, %v1470
  %v1636 = vadd.f32 %v1634, %v1635
  %1637 = vst.msk [vmem:[#allocation3 + $0x30] sm:$0xff] %vm56, %v1636
  %v1638 = vld [vmem:[#allocation2 + $0xa8] sm:$0xff]
  %v1639 = vld [vmem:[#allocation2 + $0xb0] sm:$0xff]
  %v1640 = vld [vmem:[#allocation2 + $0xb8] sm:$0xff]
  %v1642 = vsel %vm56, %v1636, 0
  %1644 = vmatprep.subr.mxu0 %v32
  %1645 = vmatpush1.msra.mxu0 %v31
  %1646 = vmatprep.subr.mxu0 %v35
  %1647 = vmatpush1.msra.mxu0 %v34
  %1648 = vmatprep.subr.mxu0 %v38
  %1649 = vmatpush1.msra.mxu0 %v37
  %1650 = vmatprep.subr.mxu0 %v41
  %1651 = vmatpush1.msra.mxu0 %v40
  %1652 = vmatprep.subr.mxu0 0.0
  %1653 = vmatpush1.msra.mxu0 0.0
  %1654 = vmatprep.subr.mxu0 0.0
  %1655 = vmatpush1.msra.mxu0 0.0
  %1656 = vmatprep.subr.mxu0 0.0
  %1657 = vmatpush1.msra.mxu0 0.0
  %1658 = vmatprep.subr.mxu0 0.0
  %1659 = vmatpush1.msra.mxu0 0.0
  %1660 = vmatprep.subr.mxu0 0.0
  %1661 = vmatpush1.msra.mxu0 0.0
  %1662 = vmatprep.subr.mxu0 0.0
  %1663 = vmatpush1.msra.mxu0 0.0
  %1664 = vmatprep.subr.mxu0 0.0
  %1665 = vmatpush1.msra.mxu0 0.0
  %1666 = vmatprep.subr.mxu0 0.0
  %1667 = vmatpush1.msra.mxu0 0.0
  %1668 = vmatprep.subr.mxu0 0.0
  %1669 = vmatpush1.msra.mxu0 0.0
  %1670 = vmatprep.subr.mxu0 0.0
  %1671 = vmatpush1.msra.mxu0 0.0
  %1672 = vmatprep.subr.mxu0 0.0
  %1673 = vmatpush1.msra.mxu0 0.0
  %1674 = vmatprep.subr.mxu0 0.0
  %1675 = vmatpush1.msra.mxu0 0.0
  %1676 = vmatprep.subr.mxu0 0.0
  %1677 = vmatpush1.msra.mxu0 0.0
  %1678 = vmatprep.subr.mxu0 0.0
  %1679 = vmatpush1.msra.mxu0 0.0
  %1680 = vmatprep.subr.mxu0 0.0
  %1681 = vmatpush1.msra.mxu0 0.0
  %1682 = vmatprep.subr.mxu0 0.0
  %1683 = vmatpush1.msra.mxu0 0.0
  %1684 = vmatprep.subr.mxu0 0.0
  %1685 = vmatpush1.msra.mxu0 0.0
  %1686 = vmatprep.subr.mxu0 0.0
  %1687 = vmatpush1.msra.mxu0 0.0
  %1688 = vmatprep.subr.mxu0 0.0
  %1689 = vmatpush1.msra.mxu0 0.0
  %1690 = vmatprep.subr.mxu0 0.0
  %1691 = vmatpush1.msra.mxu0 0.0
  %1692 = vmatprep.subr.mxu0 0.0
  %1693 = vmatpush1.msra.mxu0 0.0
  %1694 = vmatprep.subr.mxu0 0.0
  %1695 = vmatpush1.msra.mxu0 0.0
  %1696 = vmatprep.subr.mxu0 0.0
  %1697 = vmatpush1.msra.mxu0 0.0
  %1698 = vmatprep.subr.mxu0 0.0
  %1699 = vmatpush1.msra.mxu0 0.0
  %1700 = vmatprep.subr.mxu0 0.0
  %1701 = vmatpush1.msra.mxu0 0.0
  %1702 = vmatprep.subr.mxu0 0.0
  %1703 = vmatpush1.msra.mxu0 0.0
  %1704 = vmatprep.subr.mxu0 0.0
  %1705 = vmatpush1.msra.mxu0 0.0
  %1706 = vmatprep.subr.mxu0 0.0
  %1707 = vmatpush1.msra.mxu0 0.0
  %1708 = vmatprep.mubr.f32.mxu0 0.0
  %1709 = vmatmul.mubr.f32.gmra.mrb[0].mxu0 %v1642
  %v1710 = vpop.f32.mrb[0].mxu0
  %v1711 = vadd.f32 0.0, %v1710
  %v1712 = vpop.f32.mrb[0].mxu0
  %v1713 = vadd.f32 0.0, %v1712
  %1714 = vdwg.mxu0
  %1715 = vmatprep.subr.mxu0 0.0
  %1716 = vmatpush1.msra.mxu0 %v33
  %1717 = vmatprep.subr.mxu0 0.0
  %1718 = vmatpush1.msra.mxu0 %v36
  %1719 = vmatprep.subr.mxu0 0.0
  %1720 = vmatpush1.msra.mxu0 %v39
  %1721 = vmatprep.subr.mxu0 0.0
  %1722 = vmatpush1.msra.mxu0 %v42
  %1723 = vmatprep.subr.mxu0 0.0
  %1724 = vmatpush1.msra.mxu0 0.0
  %1725 = vmatprep.subr.mxu0 0.0
  %1726 = vmatpush1.msra.mxu0 0.0
  %1727 = vmatprep.subr.mxu0 0.0
  %1728 = vmatpush1.msra.mxu0 0.0
  %1729 = vmatprep.subr.mxu0 0.0
  %1730 = vmatpush1.msra.mxu0 0.0
  %1731 = vmatprep.subr.mxu0 0.0
  %1732 = vmatpush1.msra.mxu0 0.0
  %1733 = vmatprep.subr.mxu0 0.0
  %1734 = vmatpush1.msra.mxu0 0.0
  %1735 = vmatprep.subr.mxu0 0.0
  %1736 = vmatpush1.msra.mxu0 0.0
  %1737 = vmatprep.subr.mxu0 0.0
  %1738 = vmatpush1.msra.mxu0 0.0
  %1739 = vmatprep.subr.mxu0 0.0
  %1740 = vmatpush1.msra.mxu0 0.0
  %1741 = vmatprep.subr.mxu0 0.0
  %1742 = vmatpush1.msra.mxu0 0.0
  %1743 = vmatprep.subr.mxu0 0.0
  %1744 = vmatpush1.msra.mxu0 0.0
  %1745 = vmatprep.subr.mxu0 0.0
  %1746 = vmatpush1.msra.mxu0 0.0
  %1747 = vmatprep.subr.mxu0 0.0
  %1748 = vmatpush1.msra.mxu0 0.0
  %1749 = vmatprep.subr.mxu0 0.0
  %1750 = vmatpush1.msra.mxu0 0.0
  %1751 = vmatprep.subr.mxu0 0.0
  %1752 = vmatpush1.msra.mxu0 0.0
  %1753 = vmatprep.subr.mxu0 0.0
  %1754 = vmatpush1.msra.mxu0 0.0
  %1755 = vmatprep.subr.mxu0 0.0
  %1756 = vmatpush1.msra.mxu0 0.0
  %1757 = vmatprep.subr.mxu0 0.0
  %1758 = vmatpush1.msra.mxu0 0.0
  %1759 = vmatprep.subr.mxu0 0.0
  %1760 = vmatpush1.msra.mxu0 0.0
  %1761 = vmatprep.subr.mxu0 0.0
  %1762 = vmatpush1.msra.mxu0 0.0
  %1763 = vmatprep.subr.mxu0 0.0
  %1764 = vmatpush1.msra.mxu0 0.0
  %1765 = vmatprep.subr.mxu0 0.0
  %1766 = vmatpush1.msra.mxu0 0.0
  %1767 = vmatprep.subr.mxu0 0.0
  %1768 = vmatpush1.msra.mxu0 0.0
  %1769 = vmatprep.subr.mxu0 0.0
  %1770 = vmatpush1.msra.mxu0 0.0
  %1771 = vmatprep.subr.mxu0 0.0
  %1772 = vmatpush1.msra.mxu0 0.0
  %1773 = vmatprep.subr.mxu0 0.0
  %1774 = vmatpush1.msra.mxu0 0.0
  %1775 = vmatprep.subr.mxu0 0.0
  %1776 = vmatpush1.msra.mxu0 0.0
  %1777 = vmatprep.subr.mxu0 0.0
  %1778 = vmatpush1.msra.mxu0 0.0
  %1779 = vmatprep.mubr.f32.mxu0 0.0
  %1780 = vmatmul.mubr.f32.gmra.mrb[0].mxu0 %v1642
  %v1781 = vpop.f32.mrb[0].mxu0
  %v1782 = vadd.f32 0.0, %v1781
  %v1783 = vpop.f32.mrb[0].mxu0
  %1784 = vdwg.mxu0
  %v1785 = vadd.f32 %v1638, %v1711
  %v1786 = vmul.f32 %v1785, 0.5
  %v1787 = vtanh.pop %v1786
  %v1788 = vadd.f32 %v1787, 1.0
  %v1789 = vmul.f32 %v1788, 0.5
  %v1790 = vadd.f32 %v1639, %v1713
  %v1791 = vmul.f32 %v1790, 0.5
  %v1792 = vtanh.pop %v1791
  %v1793 = vadd.f32 %v1792, 1.0
  %v1794 = vmul.f32 %v1793, 0.5
  %v1795 = vadd.f32 %v1782, %v45
  %v1796 = vmul.f32 %v1789, %v1795
  %v1797 = vadd.f32 %v1640, %v1796
  %v1798 = vtanh.pop %v1797
  %v1799 = vsub.f32 1.0, %v1794
  %v1800 = vmul.f32 %v1799, %v1798
  %v1801 = vmul.f32 %v1794, %v1636
  %v1802 = vadd.f32 %v1800, %v1801
  %1803 = vst.msk [vmem:[#allocation3 + $0x38] sm:$0xff] %vm56, %v1802
  %v1804 = vld [vmem:[#allocation3] sm:$0xff]
  %v1805 = vld [vmem:[#allocation3 + $0x8] sm:$0xff]
  %v1806 = vld [vmem:[#allocation3 + $0x10] sm:$0xff]
  %v1807 = vld [vmem:[#allocation3 + $0x18] sm:$0xff]
  %v1808 = vld [vmem:[#allocation3 + $0x20] sm:$0xff]
  %v1809 = vld [vmem:[#allocation3 + $0x28] sm:$0xff]
  %v1810 = vld [vmem:[#allocation3 + $0x30] sm:$0xff]
  %v1811 = vld [vmem:[#allocation3 + $0x38] sm:$0xff]
  %1816 = vrot.lane.b32.xlu0 %v11, 96
  %v1817 = vpop.permute.xlu0 %1816
  %1818 = vrot.lane.b32.xlu0 %v12, 96
  %v1819 = vpop.permute.xlu0 %1818
  %1820 = vrot.lane.b32.xlu0 %v13, 96
  %v1821 = vpop.permute.xlu0 %1820
  %1822 = vrot.lane.b32.xlu0 %v14, 96
  %v1823 = vpop.permute.xlu0 %1822
  %v1829 = vsel %vm56, %v1804, 0
  %v1832 = vsel %vm56, %v1805, 0
  %v1835 = vsel %vm56, %v1806, 0
  %v1838 = vsel %vm56, %v1807, 0
  %v1841 = vsel %vm56, %v1808, 0
  %v1844 = vsel %vm56, %v1809, 0
  %v1847 = vsel %vm56, %v1810, 0
  %v1850 = vsel %vm56, %v1811, 0
  %1852 = vmatprep.subr.mxu0 0.0
  %1853 = vmatpush1.msra.mxu0 %v1817
  %1854 = vmatprep.subr.mxu0 0.0
  %1855 = vmatpush1.msra.mxu0 %v1819
  %1856 = vmatprep.subr.mxu0 0.0
  %1857 = vmatpush1.msra.mxu0 %v1821
  %1858 = vmatprep.subr.mxu0 0.0
  %1859 = vmatpush1.msra.mxu0 %v1823
  %1860 = vmatprep.subr.mxu0 0.0
  %1861 = vmatpush1.msra.mxu0 0.0
  %1862 = vmatprep.subr.mxu0 0.0
  %1863 = vmatpush1.msra.mxu0 0.0
  %1864 = vmatprep.subr.mxu0 0.0
  %1865 = vmatpush1.msra.mxu0 0.0
  %1866 = vmatprep.subr.mxu0 0.0
  %1867 = vmatpush1.msra.mxu0 0.0
  %1868 = vmatprep.subr.mxu0 0.0
  %1869 = vmatpush1.msra.mxu0 0.0
  %1870 = vmatprep.subr.mxu0 0.0
  %1871 = vmatpush1.msra.mxu0 0.0
  %1872 = vmatprep.subr.mxu0 0.0
  %1873 = vmatpush1.msra.mxu0 0.0
  %1874 = vmatprep.subr.mxu0 0.0
  %1875 = vmatpush1.msra.mxu0 0.0
  %1876 = vmatprep.subr.mxu0 0.0
  %1877 = vmatpush1.msra.mxu0 0.0
  %1878 = vmatprep.subr.mxu0 0.0
  %1879 = vmatpush1.msra.mxu0 0.0
  %1880 = vmatprep.subr.mxu0 0.0
  %1881 = vmatpush1.msra.mxu0 0.0
  %1882 = vmatprep.subr.mxu0 0.0
  %1883 = vmatpush1.msra.mxu0 0.0
  %1884 = vmatprep.subr.mxu0 0.0
  %1885 = vmatpush1.msra.mxu0 0.0
  %1886 = vmatprep.subr.mxu0 0.0
  %1887 = vmatpush1.msra.mxu0 0.0
  %1888 = vmatprep.subr.mxu0 0.0
  %1889 = vmatpush1.msra.mxu0 0.0
  %1890 = vmatprep.subr.mxu0 0.0
  %1891 = vmatpush1.msra.mxu0 0.0
  %1892 = vmatprep.subr.mxu0 0.0
  %1893 = vmatpush1.msra.mxu0 0.0
  %1894 = vmatprep.subr.mxu0 0.0
  %1895 = vmatpush1.msra.mxu0 0.0
  %1896 = vmatprep.subr.mxu0 0.0
  %1897 = vmatpush1.msra.mxu0 0.0
  %1898 = vmatprep.subr.mxu0 0.0
  %1899 = vmatpush1.msra.mxu0 0.0
  %1900 = vmatprep.subr.mxu0 0.0
  %1901 = vmatpush1.msra.mxu0 0.0
  %1902 = vmatprep.subr.mxu0 0.0
  %1903 = vmatpush1.msra.mxu0 0.0
  %1904 = vmatprep.subr.mxu0 0.0
  %1905 = vmatpush1.msra.mxu0 0.0
  %1906 = vmatprep.subr.mxu0 0.0
  %1907 = vmatpush1.msra.mxu0 0.0
  %1908 = vmatprep.subr.mxu0 0.0
  %1909 = vmatpush1.msra.mxu0 0.0
  %1910 = vmatprep.subr.mxu0 0.0
  %1911 = vmatpush1.msra.mxu0 0.0
  %1912 = vmatprep.subr.mxu0 0.0
  %1913 = vmatpush1.msra.mxu0 0.0
  %1914 = vmatprep.subr.mxu0 0.0
  %1915 = vmatpush1.msra.mxu0 0.0
  %1916 = vmatprep.mubr.f32.mxu0 0.0
  %1917 = vmatmul.mubr.f32.gmra.mrb[0].mxu0 %v1829
  %v1918 = vpop.f32.mrb[0].mxu0
  %v1919 = vadd.f32 %v46, %v1918
  %v1920 = vpop.f32.mrb[0].mxu0
  %1921 = vmatprep.mubr.f32.mxu0 0.0
  %1922 = vmatmul.mubr.f32.gmra.mrb[0].mxu0 %v1832
  %v1923 = vpop.f32.mrb[0].mxu0
  %v1924 = vadd.f32 %v46, %v1923
  %v1925 = vpop.f32.mrb[0].mxu0
  %1926 = vmatprep.mubr.f32.mxu0 0.0
  %1927 = vmatmul.mubr.f32.gmra.mrb[0].mxu0 %v1835
  %v1928 = vpop.f32.mrb[0].mxu0
  %v1929 = vadd.f32 %v46, %v1928
  %v1930 = vpop.f32.mrb[0].mxu0
  %1931 = vmatprep.mubr.f32.mxu0 0.0
  %1932 = vmatmul.mubr.f32.gmra.mrb[0].mxu0 %v1838
  %v1933 = vpop.f32.mrb[0].mxu0
  %v1934 = vadd.f32 %v46, %v1933
  %v1935 = vpop.f32.mrb[0].mxu0
  %1936 = vmatprep.mubr.f32.mxu0 0.0
  %1937 = vmatmul.mubr.f32.gmra.mrb[0].mxu0 %v1841
  %v1938 = vpop.f32.mrb[0].mxu0
  %v1939 = vadd.f32 %v46, %v1938
  %v1940 = vpop.f32.mrb[0].mxu0
  %1941 = vmatprep.mubr.f32.mxu0 0.0
  %1942 = vmatmul.mubr.f32.gmra.mrb[0].mxu0 %v1844
  %v1943 = vpop.f32.mrb[0].mxu0
  %v1944 = vadd.f32 %v46, %v1943
  %v1945 = vpop.f32.mrb[0].mxu0
  %1946 = vmatprep.mubr.f32.mxu0 0.0
  %1947 = vmatmul.mubr.f32.gmra.mrb[0].mxu0 %v1847
  %v1948 = vpop.f32.mrb[0].mxu0
  %v1949 = vadd.f32 %v46, %v1948
  %v1950 = vpop.f32.mrb[0].mxu0
  %1951 = vmatprep.mubr.f32.mxu0 0.0
  %1952 = vmatmul.mubr.f32.gmra.mrb[0].mxu0 %v1850
  %v1953 = vpop.f32.mrb[0].mxu0
  %v1954 = vadd.f32 %v46, %v1953
  %v1955 = vpop.f32.mrb[0].mxu0
  %1956 = vdwg.mxu0
  %v1957 = vmax.f32 %v1919, 0.0
  %v1958 = vmax.f32 %v1924, 0.0
  %v1959 = vmax.f32 %v1929, 0.0
  %v1960 = vmax.f32 %v1934, 0.0
  %v1961 = vmax.f32 %v1939, 0.0
  %v1962 = vmax.f32 %v1944, 0.0
  %v1963 = vmax.f32 %v1949, 0.0
  %v1964 = vmax.f32 %v1954, 0.0
  %v1966 = vsel %vm56, %v1957, 0
  %v1969 = vsel %vm56, %v1958, 0
  %v1972 = vsel %vm56, %v1959, 0
  %v1975 = vsel %vm56, %v1960, 0
  %v1978 = vsel %vm56, %v1961, 0
  %v1981 = vsel %vm56, %v1962, 0
  %v1984 = vsel %vm56, %v1963, 0
  %v1987 = vsel %vm56, %v1964, 0
  %1989 = vmatprep.subr.mxu0 0.0
  %1990 = vmatpush1.msra.mxu0 %v15
  %1991 = vmatprep.subr.mxu0 0.0
  %1992 = vmatpush1.msra.mxu0 %v16
  %1993 = vmatprep.subr.mxu0 0.0
  %1994 = vmatpush1.msra.mxu0 %v17
  %1995 = vmatprep.subr.mxu0 0.0
  %1996 = vmatpush1.msra.mxu0 %v18
  %1997 = vmatprep.subr.mxu0 0.0
  %1998 = vmatpush1.msra.mxu0 0.0
  %1999 = vmatprep.subr.mxu0 0.0
  %2000 = vmatpush1.msra.mxu0 0.0
  %2001 = vmatprep.subr.mxu0 0.0
  %2002 = vmatpush1.msra.mxu0 0.0
  %2003 = vmatprep.subr.mxu0 0.0
  %2004 = vmatpush1.msra.mxu0 0.0
  %2005 = vmatprep.subr.mxu0 0.0
  %2006 = vmatpush1.msra.mxu0 0.0
  %2007 = vmatprep.subr.mxu0 0.0
  %2008 = vmatpush1.msra.mxu0 0.0
  %2009 = vmatprep.subr.mxu0 0.0
  %2010 = vmatpush1.msra.mxu0 0.0
  %2011 = vmatprep.subr.mxu0 0.0
  %2012 = vmatpush1.msra.mxu0 0.0
  %2013 = vmatprep.subr.mxu0 0.0
  %2014 = vmatpush1.msra.mxu0 0.0
  %2015 = vmatprep.subr.mxu0 0.0
  %2016 = vmatpush1.msra.mxu0 0.0
  %2017 = vmatprep.subr.mxu0 0.0
  %2018 = vmatpush1.msra.mxu0 0.0
  %2019 = vmatprep.subr.mxu0 0.0
  %2020 = vmatpush1.msra.mxu0 0.0
  %2021 = vmatprep.subr.mxu0 0.0
  %2022 = vmatpush1.msra.mxu0 0.0
  %2023 = vmatprep.subr.mxu0 0.0
  %2024 = vmatpush1.msra.mxu0 0.0
  %2025 = vmatprep.subr.mxu0 0.0
  %2026 = vmatpush1.msra.mxu0 0.0
  %2027 = vmatprep.subr.mxu0 0.0
  %2028 = vmatpush1.msra.mxu0 0.0
  %2029 = vmatprep.subr.mxu0 0.0
  %2030 = vmatpush1.msra.mxu0 0.0
  %2031 = vmatprep.subr.mxu0 0.0
  %2032 = vmatpush1.msra.mxu0 0.0
  %2033 = vmatprep.subr.mxu0 0.0
  %2034 = vmatpush1.msra.mxu0 0.0
  %2035 = vmatprep.subr.mxu0 0.0
  %2036 = vmatpush1.msra.mxu0 0.0
  %2037 = vmatprep.subr.mxu0 0.0
  %2038 = vmatpush1.msra.mxu0 0.0
  %2039 = vmatprep.subr.mxu0 0.0
  %2040 = vmatpush1.msra.mxu0 0.0
  %2041 = vmatprep.subr.mxu0 0.0
  %2042 = vmatpush1.msra.mxu0 0.0
  %2043 = vmatprep.subr.mxu0 0.0
  %2044 = vmatpush1.msra.mxu0 0.0
  %2045 = vmatprep.subr.mxu0 0.0
  %2046 = vmatpush1.msra.mxu0 0.0
  %2047 = vmatprep.subr.mxu0 0.0
  %2048 = vmatpush1.msra.mxu0 0.0
  %2049 = vmatprep.subr.mxu0 0.0
  %2050 = vmatpush1.msra.mxu0 0.0
  %2051 = vmatprep.subr.mxu0 0.0
  %2052 = vmatpush1.msra.mxu0 0.0
  %2053 = vmatprep.mubr.f32.mxu0 0.0
  %2054 = vmatmul.mubr.f32.gmra.mrb[0].mxu0 %v1966
  %v2055 = vpop.f32.mrb[0].mxu0
  %v2056 = vadd.f32 %v47, %v2055
  %v2057 = vpop.f32.mrb[0].mxu0
  %2058 = vmatprep.mubr.f32.mxu0 0.0
  %2059 = vmatmul.mubr.f32.gmra.mrb[0].mxu0 %v1969
  %v2060 = vpop.f32.mrb[0].mxu0
  %v2061 = vadd.f32 %v47, %v2060
  %v2062 = vpop.f32.mrb[0].mxu0
  %2063 = vmatprep.mubr.f32.mxu0 0.0
  %2064 = vmatmul.mubr.f32.gmra.mrb[0].mxu0 %v1972
  %v2065 = vpop.f32.mrb[0].mxu0
  %v2066 = vadd.f32 %v47, %v2065
  %v2067 = vpop.f32.mrb[0].mxu0
  %2068 = vmatprep.mubr.f32.mxu0 0.0
  %2069 = vmatmul.mubr.f32.gmra.mrb[0].mxu0 %v1975
  %v2070 = vpop.f32.mrb[0].mxu0
  %v2071 = vadd.f32 %v47, %v2070
  %v2072 = vpop.f32.mrb[0].mxu0
  %2073 = vmatprep.mubr.f32.mxu0 0.0
  %2074 = vmatmul.mubr.f32.gmra.mrb[0].mxu0 %v1978
  %v2075 = vpop.f32.mrb[0].mxu0
  %v2076 = vadd.f32 %v47, %v2075
  %v2077 = vpop.f32.mrb[0].mxu0
  %2078 = vmatprep.mubr.f32.mxu0 0.0
  %2079 = vmatmul.mubr.f32.gmra.mrb[0].mxu0 %v1981
  %v2080 = vpop.f32.mrb[0].mxu0
  %v2081 = vadd.f32 %v47, %v2080
  %v2082 = vpop.f32.mrb[0].mxu0
  %2083 = vmatprep.mubr.f32.mxu0 0.0
  %2084 = vmatmul.mubr.f32.gmra.mrb[0].mxu0 %v1984
  %v2085 = vpop.f32.mrb[0].mxu0
  %v2086 = vadd.f32 %v47, %v2085
  %v2087 = vpop.f32.mrb[0].mxu0
  %2088 = vmatprep.mubr.f32.mxu0 0.0
  %2089 = vmatmul.mubr.f32.gmra.mrb[0].mxu0 %v1987
  %v2090 = vpop.f32.mrb[0].mxu0
  %v2091 = vadd.f32 %v47, %v2090
  %v2092 = vpop.f32.mrb[0].mxu0
  %2093 = vdwg.mxu0
  %v2094 = vlaneseq
  %v2095 = vand.u32 %v2094, 127
  %vm2096 = vcmp.lt.s32.totalorder %v2095, 4
  %v2097 = vmax.f32 %v2056, 0.0
  %v2098 = vmax.f32 %v2061, 0.0
  %v2099 = vmax.f32 %v2066, 0.0
  %v2100 = vmax.f32 %v2071, 0.0
  %v2101 = vmax.f32 %v2076, 0.0
  %v2102 = vmax.f32 %v2081, 0.0
  %v2103 = vmax.f32 %v2086, 0.0
  %v2104 = vmax.f32 %v2091, 0.0
  %vm2105 = vcmp.ne.f32.partialorder %v2056, %v2056
  %vm2106 = vcmp.ne.f32.partialorder %v2061, %v2061
  %vm2107 = vcmp.ne.f32.partialorder %v2066, %v2066
  %vm2108 = vcmp.ne.f32.partialorder %v2071, %v2071
  %vm2109 = vcmp.ne.f32.partialorder %v2076, %v2076
  %vm2110 = vcmp.ne.f32.partialorder %v2081, %v2081
  %vm2111 = vcmp.ne.f32.partialorder %v2086, %v2086
  %vm2112 = vcmp.ne.f32.partialorder %v2091, %v2091
  %v2113 = vadd.f32 %v2056, 0.0
  %v2114 = vadd.f32 %v2061, 0.0
  %v2115 = vadd.f32 %v2066, 0.0
  %v2116 = vadd.f32 %v2071, 0.0
  %v2117 = vadd.f32 %v2076, 0.0
  %v2118 = vadd.f32 %v2081, 0.0
  %v2119 = vadd.f32 %v2086, 0.0
  %v2120 = vadd.f32 %v2091, 0.0
  %v2121 = vand.u32 2147483647, %v2056
  %v2122 = vand.u32 2147483647, %v2061
  %v2123 = vand.u32 2147483647, %v2066
  %v2124 = vand.u32 2147483647, %v2071
  %v2125 = vand.u32 2147483647, %v2076
  %v2126 = vand.u32 2147483647, %v2081
  %v2127 = vand.u32 2147483647, %v2086
  %v2128 = vand.u32 2147483647, %v2091
  %v2129 = vsub.f32 0.0, %v2121
  %v2130 = vsub.f32 0.0, %v2122
  %v2131 = vsub.f32 0.0, %v2123
  %v2132 = vsub.f32 0.0, %v2124
  %v2133 = vsub.f32 0.0, %v2125
  %v2134 = vsub.f32 0.0, %v2126
  %v2135 = vsub.f32 0.0, %v2127
  %v2136 = vsub.f32 0.0, %v2128
  %v2137 = vmul.f32 %v2129, 1.442695
  %v2138 = vpow.pop %v2137
  %v2139 = vmul.f32 %v2130, 1.442695
  %v2140 = vpow.pop %v2139
  %v2141 = vmul.f32 %v2131, 1.442695
  %v2142 = vpow.pop %v2141
  %v2143 = vmul.f32 %v2132, 1.442695
  %v2144 = vpow.pop %v2143
  %v2145 = vmul.f32 %v2133, 1.442695
  %v2146 = vpow.pop %v2145
  %v2147 = vmul.f32 %v2134, 1.442695
  %v2148 = vpow.pop %v2147
  %v2149 = vmul.f32 %v2135, 1.442695
  %v2150 = vpow.pop %v2149
  %v2151 = vmul.f32 %v2136, 1.442695
  %v2152 = vpow.pop %v2151
  %v2153 = vadd.f32 %v2138, 1.0
  %v2154 = vlog2.pop %v2153
  %v2155 = vmul.f32 %v2154, 0.6931472
  %v2156 = vmul.f32 -0.5, %v2138
  %v2157 = vadd.f32 %v2156, 1.0
  %v2158 = vmul.f32 %v2157, %v2138
  %v2159 = vand.u32 2147483647, %v2138
  %vm2160 = vcmp.lt.f32.partialorder %v2159, 0.0004427343
  %v2161 = vsel %vm2160, %v2158, %v2155
  %v2162 = vadd.f32 %v2140, 1.0
  %v2163 = vlog2.pop %v2162
  %v2164 = vmul.f32 %v2163, 0.6931472
  %v2165 = vmul.f32 -0.5, %v2140
  %v2166 = vadd.f32 %v2165, 1.0
  %v2167 = vmul.f32 %v2166, %v2140
  %v2168 = vand.u32 2147483647, %v2140
  %vm2169 = vcmp.lt.f32.partialorder %v2168, 0.0004427343
  %v2170 = vsel %vm2169, %v2167, %v2164
  %v2171 = vadd.f32 %v2142, 1.0
  %v2172 = vlog2.pop %v2171
  %v2173 = vmul.f32 %v2172, 0.6931472
  %v2174 = vmul.f32 -0.5, %v2142
  %v2175 = vadd.f32 %v2174, 1.0
  %v2176 = vmul.f32 %v2175, %v2142
  %v2177 = vand.u32 2147483647, %v2142
  %vm2178 = vcmp.lt.f32.partialorder %v2177, 0.0004427343
  %v2179 = vsel %vm2178, %v2176, %v2173
  %v2180 = vadd.f32 %v2144, 1.0
  %v2181 = vlog2.pop %v2180
  %v2182 = vmul.f32 %v2181, 0.6931472
  %v2183 = vmul.f32 -0.5, %v2144
  %v2184 = vadd.f32 %v2183, 1.0
  %v2185 = vmul.f32 %v2184, %v2144
  %v2186 = vand.u32 2147483647, %v2144
  %vm2187 = vcmp.lt.f32.partialorder %v2186, 0.0004427343
  %v2188 = vsel %vm2187, %v2185, %v2182
  %v2189 = vadd.f32 %v2146, 1.0
  %v2190 = vlog2.pop %v2189
  %v2191 = vmul.f32 %v2190, 0.6931472
  %v2192 = vmul.f32 -0.5, %v2146
  %v2193 = vadd.f32 %v2192, 1.0
  %v2194 = vmul.f32 %v2193, %v2146
  %v2195 = vand.u32 2147483647, %v2146
  %vm2196 = vcmp.lt.f32.partialorder %v2195, 0.0004427343
  %v2197 = vsel %vm2196, %v2194, %v2191
  %v2198 = vadd.f32 %v2148, 1.0
  %v2199 = vlog2.pop %v2198
  %v2200 = vmul.f32 %v2199, 0.6931472
  %v2201 = vmul.f32 -0.5, %v2148
  %v2202 = vadd.f32 %v2201, 1.0
  %v2203 = vmul.f32 %v2202, %v2148
  %v2204 = vand.u32 2147483647, %v2148
  %vm2205 = vcmp.lt.f32.partialorder %v2204, 0.0004427343
  %v2206 = vsel %vm2205, %v2203, %v2200
  %v2207 = vadd.f32 %v2150, 1.0
  %v2208 = vlog2.pop %v2207
  %v2209 = vmul.f32 %v2208, 0.6931472
  %v2210 = vmul.f32 -0.5, %v2150
  %v2211 = vadd.f32 %v2210, 1.0
  %v2212 = vmul.f32 %v2211, %v2150
  %v2213 = vand.u32 2147483647, %v2150
  %vm2214 = vcmp.lt.f32.partialorder %v2213, 0.0004427343
  %v2215 = vsel %vm2214, %v2212, %v2209
  %v2216 = vadd.f32 %v2152, 1.0
  %v2217 = vlog2.pop %v2216
  %v2218 = vmul.f32 %v2217, 0.6931472
  %v2219 = vmul.f32 -0.5, %v2152
  %v2220 = vadd.f32 %v2219, 1.0
  %v2221 = vmul.f32 %v2220, %v2152
  %v2222 = vand.u32 2147483647, %v2152
  %vm2223 = vcmp.lt.f32.partialorder %v2222, 0.0004427343
  %v2224 = vsel %vm2223, %v2221, %v2218
  %v2225 = vadd.f32 %v2097, %v2161
  %v2226 = vadd.f32 %v2098, %v2170
  %v2227 = vadd.f32 %v2099, %v2179
  %v2228 = vadd.f32 %v2100, %v2188
  %v2229 = vadd.f32 %v2101, %v2197
  %v2230 = vadd.f32 %v2102, %v2206
  %v2231 = vadd.f32 %v2103, %v2215
  %v2232 = vadd.f32 %v2104, %v2224
  %v2233 = vsel %vm2105, %v2113, %v2225
  %v2234 = vsel %vm2106, %v2114, %v2226
  %v2235 = vsel %vm2107, %v2115, %v2227
  %v2236 = vsel %vm2108, %v2116, %v2228
  %v2237 = vsel %vm2109, %v2117, %v2229
  %v2238 = vsel %vm2110, %v2118, %v2230
  %v2239 = vsel %vm2111, %v2119, %v2231
  %v2240 = vsel %vm2112, %v2120, %v2232
  %v2241 = vadd.f32 %v2233, 0.0001
  %v2242 = vadd.f32 %v2234, 0.0001
  %v2243 = vadd.f32 %v2235, 0.0001
  %v2244 = vadd.f32 %v2236, 0.0001
  %v2245 = vadd.f32 %v2237, 0.0001
  %v2246 = vadd.f32 %v2238, 0.0001
  %v2247 = vadd.f32 %v2239, 0.0001
  %v2248 = vadd.f32 %v2240, 0.0001
  %v2249 = vsel %vm2096, %v2056, %v2241
  %v2250 = vsel %vm2096, %v2061, %v2242
  %v2251 = vsel %vm2096, %v2066, %v2243
  %v2252 = vsel %vm2096, %v2071, %v2244
  %v2253 = vsel %vm2096, %v2076, %v2245
  %v2254 = vsel %vm2096, %v2081, %v2246
  %v2255 = vsel %vm2096, %v2086, %v2247
  %v2256 = vsel %vm2096, %v2091, %v2248
  %2257 = vst [vmem:[%s2] sm:$0xff] %v2249
  %2258 = vst [vmem:[%s2 + $0x8] sm:$0xff] %v2250
  %2259 = vst [vmem:[%s2 + $0x10] sm:$0xff] %v2251
  %2260 = vst [vmem:[%s2 + $0x18] sm:$0xff] %v2252
  %2261 = vst [vmem:[%s2 + $0x20] sm:$0xff] %v2253
  %2262 = vst [vmem:[%s2 + $0x28] sm:$0xff] %v2254
  %2263 = vst [vmem:[%s2 + $0x30] sm:$0xff] %v2255
  %2264 = vst [vmem:[%s2 + $0x38] sm:$0xff] %v2256
  // Predicated region
  $region10: #{rnn_policy_forward.1} parent=0 // pred_check
    _
  $region11: #{rnn_policy_forward.1} parent=0 // pred_check_branch
    %2266 = sbr.rel (0) target = $region13
  $region12: #{rnn_policy_forward.1} parent=0 // pred_region
    _
  $region13: #{rnn_policy_forward.1} parent=0 // pred_fallthru
    _
  // Predicated region
  $region14: #{rnn_policy_forward.1} parent=0 // pred_check
    _
  $region15: #{rnn_policy_forward.1} parent=0 // pred_check_branch
    %2268 = sbr.rel (0) target = $region17
  $region16: #{rnn_policy_forward.1} parent=0 // pred_region
    _
  $region17: #{rnn_policy_forward.1} parent=0 // pred_fallthru
    _

</llo_original>
